<compile_context>
chip_gen: v6e
topology: v6e:2x2x1
jax: 0.10.0
libtpu: 0.0.40
codegen_flags: <defaults>
</compile_context>

<pallas_src>
from functools import partial

import numpy as np
import jax
import jax.numpy as jnp
from jax import lax
from jax.experimental import pallas as pl
from jax.experimental.pallas import tpu as pltpu


# ----------------------------------------------------------------------------
# Fused MHA kernel: (per-batch) kv-proj + (per q-tile) q-proj + attn + o-proj
# ----------------------------------------------------------------------------
def _fused_mha_kernel(xq_ref, xkv_ref, qw_ref, qb_ref, kvw_ref, kvb_ref,
                      ow_ref, ob_ref, o_ref, kh_ref, vh_ref, oslab_ref,
                      *, num_heads, cqk, cv, num_qk_channels, mxu_dtype):
    f32 = jnp.float32

    # --- K/V projection: once per batch element (first q-tile only). --------
    # Scratch persists across the "arbitrary" q-tile axis, so later q-tiles of
    # the same batch element reuse it directly.
    @pl.when(pl.program_id(1) == 0)
    def _():
        kv = jnp.dot(xkv_ref[0], kvw_ref[...],
                     preferred_element_type=f32) + kvb_ref[...]
        kv = kv.astype(mxu_dtype)                      # cast once, full tensor
        for h in range(num_heads):                     # head-major scratch
            kh_ref[h] = kv[:, h * cqk:(h + 1) * cqk]
            vh_ref[h] = kv[:, num_qk_channels + h * cv:
                              num_qk_channels + (h + 1) * cv]

    # --- Q projection (dp_scale pre-folded into qw/qb); cast once. ----------
    q = (jnp.dot(xq_ref[0], qw_ref[...],
                 preferred_element_type=f32) + qb_ref[...]).astype(mxu_dtype)

    contract_channel = (((1,), (1,)), ((), ()))    # (tn,c) x (L,c) -> (tn,L)
    for h in range(num_heads):
        q_h = q[:, h * cqk:(h + 1) * cqk]
        s = lax.dot_general(q_h, kh_ref[h], contract_channel,
                            preferred_element_type=f32)           # (tn, L) f32
        s = s - jnp.max(s, axis=-1, keepdims=True)
        p = jnp.exp(s)
        denom = jnp.sum(p, axis=-1, keepdims=True)                 # (tn, 1)
        o_h = jnp.dot(p.astype(mxu_dtype), vh_ref[h],
                      preferred_element_type=f32)                  # (tn, cv)
        # fold the softmax normalization into the small PV output (not into P)
        o_h = o_h * pl.reciprocal(denom, approx=True)
        oslab_ref[:, h * cv:(h + 1) * cv] = o_h.astype(mxu_dtype)

    # lane-dense (tn, H*cv) slab -> output projection
    out = jnp.dot(oslab_ref[...], ow_ref[...],
                  preferred_element_type=f32) + ob_ref[...]
    o_ref[0] = out.astype(o_ref.dtype)


# ----------------------------------------------------------------------------
# Module wrapper (parameter setup in plain JAX)
# ----------------------------------------------------------------------------
class MultiHeadAttentionPallas:
    def __init__(
        self,
        num_heads,
        num_q_input_channels,
        num_kv_input_channels,
        num_qk_channels=None,
        num_v_channels=None,
        num_output_channels=None,
        *,
        key,
        param_dtype=jnp.float32,
        mxu_dtype=jnp.float32,   # set to jnp.bfloat16 to feed the MXU in bf16
    ):
        if num_qk_channels is None:
            num_qk_channels = num_q_input_channels
        if num_v_channels is None:
            num_v_channels = num_qk_channels
        if num_output_channels is None:
            num_output_channels = num_q_input_channels
        assert num_qk_channels % num_heads == 0
        assert num_v_channels % num_heads == 0

        self.num_heads = num_heads
        self.num_qk_channels = num_qk_channels
        self.num_v_channels = num_v_channels
        self.num_output_channels = num_output_channels
        self.dp_scale = float((num_qk_channels // num_heads) ** (-0.5))
        self.mxu_dtype = mxu_dtype

        keys = jax.random.split(key, 8)

        def init_linear(kw, kb, din, dout):
            # deterministic small init (synthetic weights, not a checkpoint);
            # stored pre-transposed as (in, out) for lane-contiguous MXU RHS.
            w = jax.random.normal(kw, (din, dout), param_dtype) * 0.05
            b = jax.random.normal(kb, (1, dout), param_dtype) * 0.05
            return w, b

        # raw (unfolded, PyTorch-order) parameters, kept for the reference
        self.q_w_raw, self.q_b_raw = init_linear(
            keys[0], keys[1], num_q_input_channels, num_qk_channels)
        self.k_w_raw, self.k_b_raw = init_linear(
            keys[2], keys[3], num_kv_input_channels, num_qk_channels)
        self.v_w_raw, self.v_b_raw = init_linear(
            keys[4], keys[5], num_kv_input_channels, num_v_channels)
        self.o_w_raw, self.o_b_raw = init_linear(
            keys[6], keys[7], num_v_channels, num_output_channels)

        # kernel-ready parameters:
        # fold dp_scale into the Q projection ((x@W + b)*s == x@(W*s) + b*s)
        self.q_w = self.q_w_raw * self.dp_scale
        self.q_b = self.q_b_raw * self.dp_scale
        # fuse K and V projections into a single matmul
        self.kv_w = jnp.concatenate([self.k_w_raw, self.v_w_raw], axis=1)
        self.kv_b = jnp.concatenate([self.k_b_raw, self.v_b_raw], axis=1)
        self.o_w = self.o_w_raw
        self.o_b = self.o_b_raw

    # q-row tiling: full N when moderate; otherwise largest tile whose
    # transient (tn, L) f32 score slab stays modest (fewer grid steps, MXU
    # M-dim stays full on v6e's 2x256 MXU).
    @staticmethod
    def _pick_q_tile(n, l):
        if n <= 512:
            return n
        for tn in (512, 256, 128):
            if tn * l * 4 <= (8 << 20):
                return tn
        return 128

    def __call__(self, x_q, x_kv):
        B, N, Dq = x_q.shape
        _, L, Dkv = x_kv.shape
        H = self.num_heads
        Cqk = self.num_qk_channels
        Cv = self.num_v_channels
        Dout = self.num_output_channels
        cqk = Cqk // H
        cv = Cv // H
        md = self.mxu_dtype
        out_dtype = x_q.dtype
        msz = np.dtype(md).itemsize
        osz = np.dtype(out_dtype).itemsize

        # cast MXU operands once in the wrapper (halves HBM traffic when bf16)
        xq = x_q.astype(md)
        xkv = x_kv.astype(md)
        qw = self.q_w.astype(md)
        kvw = self.kv_w.astype(md)
        ow = self.o_w.astype(md)

        tn = self._pick_q_tile(N, L)
        grid = (B, pl.cdiv(N, tn))

        # weights / biases never change across the grid -> single buffer.
        def resident(shape):
            return pl.BlockSpec(shape, lambda b, t: (0, 0),
                                pipeline_mode=pl.Buffered(1))

        # rough per-step VMEM estimate -> explicit scoped-VMEM limit
        # (v5e default 16 MiB / v6e 32 MiB; cap at 48 MiB for v7x headroom).
        est = (2 * tn * Dq * msz + 2 * L * Dkv * msz
               + (Dq * Cqk + Dkv * (Cqk + Cv) + Cv * Dout) * msz
               + (Cqk + (Cqk + Cv) + Dout) * 4
               + 2 * tn * Dout * osz
               + (L * (Cqk + Cv) + tn * Cv) * msz      # kh/vh/oslab scratch
               + L * (Cqk + Cv) * 4                    # transient f32 kv proj
               + 2 * tn * L * 4)                       # transient f32 scores
        vmem_limit = int(min(max(2 * est, 32 << 20), 48 << 20))

        cost = pl.CostEstimate(
            flops=2 * B * (N * Dq * Cqk + L * Dkv * (Cqk + Cv)
                           + N * L * (Cqk + Cv) + N * Cv * Dout),
            transcendentals=B * H * N * L,
            bytes_accessed=(xq.size * msz + xkv.size * msz
                            + (qw.size + kvw.size + ow.size) * msz
                            + (self.q_b.size + self.kv_b.size
                               + self.o_b.size) * 4
                            + B * N * Dout * osz),
        )

        kernel = partial(
            _fused_mha_kernel,
            num_heads=H, cqk=cqk, cv=cv, num_qk_channels=Cqk, mxu_dtype=md,
        )

        return pl.pallas_call(
            kernel,
            out_shape=jax.ShapeDtypeStruct((B, N, Dout), out_dtype),
            grid=grid,
            in_specs=[
                pl.BlockSpec((1, tn, Dq), lambda b, t: (b, t, 0)),   # x_q
                # constant over the q-tile axis -> only re-DMAed when b changes
                pl.BlockSpec((1, L, Dkv), lambda b, t: (b, 0, 0)),   # x_kv
                resident((Dq, Cqk)),             # q_w (dp_scale folded)
                resident((1, Cqk)),              # q_b
                resident((Dkv, Cqk + Cv)),       # kv_w (K|V fused)
                resident((1, Cqk + Cv)),         # kv_b
                resident((Cv, Dout)),            # o_w
                resident((1, Dout)),             # o_b
            ],
            out_specs=pl.BlockSpec((1, tn, Dout), lambda b, t: (b, t, 0)),
            scratch_shapes=[
                pltpu.VMEM((H, L, cqk), md),     # K, head-major, per-batch
                pltpu.VMEM((H, L, cv), md),      # V, head-major, per-batch
                pltpu.VMEM((tn, Cv), md),        # concatenated PV slab
            ],
            compiler_params=pltpu.CompilerParams(
                dimension_semantics=("parallel", "arbitrary"),
                vmem_limit_bytes=vmem_limit),
            cost_estimate=cost,
        )(xq, xkv, qw, self.q_b, kvw, self.kv_b, ow, self.o_b)

    # pure-JAX reference following the PyTorch op order (project -> rearrange
    # -> scale -> softmax -> PV -> o_proj), mirroring the MXU-dtype casts.
    def reference(self, x_q, x_kv):
        md = self.mxu_dtype
        f32 = jnp.float32
        B, N, _ = x_q.shape
        _, L, _ = x_kv.shape
        H = self.num_heads
        cqk = self.num_qk_channels // H
        cv = self.num_v_channels // H

        q = jnp.dot(x_q.astype(md), self.q_w_raw.astype(md),
                    preferred_element_type=f32) + self.q_b_raw
        k = jnp.dot(x_kv.astype(md), self.k_w_raw.astype(md),
                    preferred_element_type=f32) + self.k_b_raw
        v = jnp.dot(x_kv.astype(md), self.v_w_raw.astype(md),
                    preferred_element_type=f32) + self.v_b_raw

        # b n (h c) -> b h n c ; scale after projection (PyTorch order)
        qh = q.reshape(B, N, H, cqk).transpose(0, 2, 1, 3) * self.dp_scale
        kh = k.reshape(B, L, H, cqk).transpose(0, 2, 1, 3)
        vh = v.reshape(B, L, H, cv).transpose(0, 2, 1, 3)

        s = jnp.einsum("bhnc,bhlc->bhnl", qh.astype(md), kh.astype(md),
                       preferred_element_type=f32)
        p = jax.nn.softmax(s, axis=-1)
        o = jnp.einsum("bhnl,bhlc->bhnc", p.astype(md), vh.astype(md),
                       preferred_element_type=f32)
        o = o.transpose(0, 2, 1, 3).reshape(B, N, self.num_v_channels)
        out = jnp.dot(o.astype(md), self.o_w_raw.astype(md),
                      preferred_element_type=f32) + self.o_b_raw
        return out.astype(x_q.dtype)


if __name__ == "__main__":
    key = jax.random.PRNGKey(0)
    k_params, k_q, k_kv = jax.random.split(key, 3)

    # small shapes consistent with the module's forward
    B, N, L = 2, 16, 32
    num_q_input_channels = 32
    num_kv_input_channels = 16
    num_heads = 4

    x_q = jax.random.normal(k_q, (B, N, num_q_input_channels), jnp.float32)
    x_kv = jax.random.normal(k_kv, (B, L, num_kv_input_channels), jnp.float32)

    mha = MultiHeadAttentionPallas(
        num_heads=num_heads,
        num_q_input_channels=num_q_input_channels,
        num_kv_input_channels=num_kv_input_channels,
        key=k_params,
        mxu_dtype=jnp.float32,
    )

    # --- f32 MXU path (tight check; approx reciprocal allows small slack) ---
    out = jax.block_until_ready(mha(x_q, x_kv))
    ref = mha.reference(x_q, x_kv)
    assert out.shape == (B, N, num_q_input_channels)
    assert jnp.allclose(out, ref, atol=5e-3, rtol=5e-3), \
        float(jnp.max(jnp.abs(out - ref)))

    # --- bf16 MXU path (f32 softmax + accumulation; looser tolerance) -------
    mha.mxu_dtype = jnp.bfloat16
    out_bf16 = jax.block_until_ready(mha(x_q, x_kv))
    ref_bf16 = mha.reference(x_q, x_kv)
    assert out_bf16.dtype == jnp.float32
    assert jnp.allclose(out_bf16, ref_bf16, atol=3e-2, rtol=3e-2), \
        float(jnp.max(jnp.abs(out_bf16 - ref_bf16)))

    print("KERNEL_OK")
</pallas_src>

<mosaic_0001>
module attributes {stable_mosaic.version = 11 : i64} {
  func.func @_fused_mha_kernel(%arg0: i32, %arg1: i32, %arg2: memref<1x16x32xf32, #tpu.memory_space<vmem>>, %arg3: memref<1x32x16xf32, #tpu.memory_space<vmem>>, %arg4: memref<32x32xf32, #tpu.memory_space<vmem>>, %arg5: memref<1x32xf32, #tpu.memory_space<vmem>>, %arg6: memref<16x64xf32, #tpu.memory_space<vmem>>, %arg7: memref<1x64xf32, #tpu.memory_space<vmem>>, %arg8: memref<32x32xf32, #tpu.memory_space<vmem>>, %arg9: memref<1x32xf32, #tpu.memory_space<vmem>>, %arg10: memref<1x16x32xf32, #tpu.memory_space<vmem>>, %arg11: memref<4x32x8xf32, #tpu.memory_space<vmem>>, %arg12: memref<4x32x8xf32, #tpu.memory_space<vmem>>, %arg13: memref<16x32xf32, #tpu.memory_space<vmem>>) attributes {dimension_semantics = [#tpu.dimension_semantics<parallel>, #tpu.dimension_semantics<arbitrary>], iteration_bounds = array<i64: 2, 1>, scalar_prefetch = 0 : i64, scratch_operands = 3 : i64, tpu.core_type = #tpu.core_type<tc>, window_params = [{transform_indices = @transform_0, window_bounds = array<i64: 1, 16, 32>}, {transform_indices = @transform_1, window_bounds = array<i64: 1, 32, 16>}, {pipeline_mode = #tpu.pipeline_mode<synchronous>, transform_indices = @transform_2, window_bounds = array<i64: 32, 32>}, {pipeline_mode = #tpu.pipeline_mode<synchronous>, transform_indices = @transform_3, window_bounds = array<i64: 1, 32>}, {pipeline_mode = #tpu.pipeline_mode<synchronous>, transform_indices = @transform_4, window_bounds = array<i64: 16, 64>}, {pipeline_mode = #tpu.pipeline_mode<synchronous>, transform_indices = @transform_5, window_bounds = array<i64: 1, 64>}, {pipeline_mode = #tpu.pipeline_mode<synchronous>, transform_indices = @transform_6, window_bounds = array<i64: 32, 32>}, {pipeline_mode = #tpu.pipeline_mode<synchronous>, transform_indices = @transform_7, window_bounds = array<i64: 1, 32>}, {transform_indices = @transform_8, window_bounds = array<i64: 1, 16, 32>}]} {
    %c0_i32 = arith.constant 0 : i32
    %0 = arith.cmpi eq, %arg1, %c0_i32 : i32
    %1 = arith.extui %0 : i1 to i32
    %c0_i32_0 = arith.constant 0 : i32
    %2 = arith.cmpi ne, %1, %c0_i32_0 : i32
    scf.if %2 {
      %c0_59 = arith.constant 0 : index
      %c0_60 = arith.constant 0 : index
      %c0_61 = arith.constant 0 : index
      %91 = vector.load %arg3[%c0_59, %c0_60, %c0_61] : memref<1x32x16xf32, #tpu.memory_space<vmem>>, vector<1x32x16xf32>
      %92 = vector.shape_cast %91 : vector<1x32x16xf32> to vector<32x16xf32>
      %c0_62 = arith.constant 0 : index
      %c0_63 = arith.constant 0 : index
      %93 = vector.load %arg6[%c0_62, %c0_63] : memref<16x64xf32, #tpu.memory_space<vmem>>, vector<16x64xf32>
      %cst_64 = arith.constant dense<0.000000e+00> : vector<32x64xf32>
      %94 = tpu.matmul %92, %93, %cst_64 {dimension_numbers = #tpu.dot_dimension_numbers<[1], [0], [0], [1], [0, 0, 1, 1], [], []>} : vector<32x16xf32>, vector<16x64xf32>, vector<32x64xf32> -> vector<32x64xf32>
      %c0_65 = arith.constant 0 : index
      %c0_66 = arith.constant 0 : index
      %95 = vector.load %arg7[%c0_65, %c0_66] : memref<1x64xf32, #tpu.memory_space<vmem>>, vector<1x64xf32>
      %96 = vector.broadcast %95 : vector<1x64xf32> to vector<32x64xf32>
      %97 = arith.addf %94, %96 : vector<32x64xf32>
      %98 = vector.extract_strided_slice %97 {offsets = [0, 0], sizes = [32, 8], strides = [1, 1]} : vector<32x64xf32> to vector<32x8xf32>
      %c0_67 = arith.constant 0 : index
      %c0_68 = arith.constant 0 : index
      %c0_69 = arith.constant 0 : index
      %99 = vector.load %arg11[%c0_67, %c0_68, %c0_69] : memref<4x32x8xf32, #tpu.memory_space<vmem>>, vector<1x32x8xf32>
      %100 = vector.shape_cast %99 : vector<1x32x8xf32> to vector<32x8xf32>
      %101 = vector.shape_cast %98 : vector<32x8xf32> to vector<1x32x8xf32>
      tpu.vector_store %arg11[%c0_67, %c0_68, %c0_69], %101 {strides = array<i32>} : memref<4x32x8xf32, #tpu.memory_space<vmem>>, vector<1x32x8xf32>,
      %102 = vector.extract_strided_slice %97 {offsets = [0, 32], sizes = [32, 8], strides = [1, 1]} : vector<32x64xf32> to vector<32x8xf32>
      %c0_70 = arith.constant 0 : index
      %c0_71 = arith.constant 0 : index
      %c0_72 = arith.constant 0 : index
      %103 = vector.load %arg12[%c0_70, %c0_71, %c0_72] : memref<4x32x8xf32, #tpu.memory_space<vmem>>, vector<1x32x8xf32>
      %104 = vector.shape_cast %103 : vector<1x32x8xf32> to vector<32x8xf32>
      %105 = vector.shape_cast %102 : vector<32x8xf32> to vector<1x32x8xf32>
      tpu.vector_store %arg12[%c0_70, %c0_71, %c0_72], %105 {strides = array<i32>} : memref<4x32x8xf32, #tpu.memory_space<vmem>>, vector<1x32x8xf32>,
      %106 = vector.extract_strided_slice %97 {offsets = [0, 8], sizes = [32, 8], strides = [1, 1]} : vector<32x64xf32> to vector<32x8xf32>
      %c1_73 = arith.constant 1 : index
      %c0_74 = arith.constant 0 : index
      %c0_75 = arith.constant 0 : index
      %107 = vector.load %arg11[%c1_73, %c0_74, %c0_75] : memref<4x32x8xf32, #tpu.memory_space<vmem>>, vector<1x32x8xf32>
      %108 = vector.shape_cast %107 : vector<1x32x8xf32> to vector<32x8xf32>
      %109 = vector.shape_cast %106 : vector<32x8xf32> to vector<1x32x8xf32>
      tpu.vector_store %arg11[%c1_73, %c0_74, %c0_75], %109 {strides = array<i32>} : memref<4x32x8xf32, #tpu.memory_space<vmem>>, vector<1x32x8xf32>,
      %110 = vector.extract_strided_slice %97 {offsets = [0, 40], sizes = [32, 8], strides = [1, 1]} : vector<32x64xf32> to vector<32x8xf32>
      %c1_76 = arith.constant 1 : index
      %c0_77 = arith.constant 0 : index
      %c0_78 = arith.constant 0 : index
      %111 = vector.load %arg12[%c1_76, %c0_77, %c0_78] : memref<4x32x8xf32, #tpu.memory_space<vmem>>, vector<1x32x8xf32>
      %112 = vector.shape_cast %111 : vector<1x32x8xf32> to vector<32x8xf32>
      %113 = vector.shape_cast %110 : vector<32x8xf32> to vector<1x32x8xf32>
      tpu.vector_store %arg12[%c1_76, %c0_77, %c0_78], %113 {strides = array<i32>} : memref<4x32x8xf32, #tpu.memory_space<vmem>>, vector<1x32x8xf32>,
      %114 = vector.extract_strided_slice %97 {offsets = [0, 16], sizes = [32, 8], strides = [1, 1]} : vector<32x64xf32> to vector<32x8xf32>
      %c2_79 = arith.constant 2 : index
      %c0_80 = arith.constant 0 : index
      %c0_81 = arith.constant 0 : index
      %115 = vector.load %arg11[%c2_79, %c0_80, %c0_81] : memref<4x32x8xf32, #tpu.memory_space<vmem>>, vector<1x32x8xf32>
      %116 = vector.shape_cast %115 : vector<1x32x8xf32> to vector<32x8xf32>
      %117 = vector.shape_cast %114 : vector<32x8xf32> to vector<1x32x8xf32>
      tpu.vector_store %arg11[%c2_79, %c0_80, %c0_81], %117 {strides = array<i32>} : memref<4x32x8xf32, #tpu.memory_space<vmem>>, vector<1x32x8xf32>,
      %118 = vector.extract_strided_slice %97 {offsets = [0, 48], sizes = [32, 8], strides = [1, 1]} : vector<32x64xf32> to vector<32x8xf32>
      %c2_82 = arith.constant 2 : index
      %c0_83 = arith.constant 0 : index
      %c0_84 = arith.constant 0 : index
      %119 = vector.load %arg12[%c2_82, %c0_83, %c0_84] : memref<4x32x8xf32, #tpu.memory_space<vmem>>, vector<1x32x8xf32>
      %120 = vector.shape_cast %119 : vector<1x32x8xf32> to vector<32x8xf32>
      %121 = vector.shape_cast %118 : vector<32x8xf32> to vector<1x32x8xf32>
      tpu.vector_store %arg12[%c2_82, %c0_83, %c0_84], %121 {strides = array<i32>} : memref<4x32x8xf32, #tpu.memory_space<vmem>>, vector<1x32x8xf32>,
      %122 = vector.extract_strided_slice %97 {offsets = [0, 24], sizes = [32, 8], strides = [1, 1]} : vector<32x64xf32> to vector<32x8xf32>
      %c3_85 = arith.constant 3 : index
      %c0_86 = arith.constant 0 : index
      %c0_87 = arith.constant 0 : index
      %123 = vector.load %arg11[%c3_85, %c0_86, %c0_87] : memref<4x32x8xf32, #tpu.memory_space<vmem>>, vector<1x32x8xf32>
      %124 = vector.shape_cast %123 : vector<1x32x8xf32> to vector<32x8xf32>
      %125 = vector.shape_cast %122 : vector<32x8xf32> to vector<1x32x8xf32>
      tpu.vector_store %arg11[%c3_85, %c0_86, %c0_87], %125 {strides = array<i32>} : memref<4x32x8xf32, #tpu.memory_space<vmem>>, vector<1x32x8xf32>,
      %126 = vector.extract_strided_slice %97 {offsets = [0, 56], sizes = [32, 8], strides = [1, 1]} : vector<32x64xf32> to vector<32x8xf32>
      %c3_88 = arith.constant 3 : index
      %c0_89 = arith.constant 0 : index
      %c0_90 = arith.constant 0 : index
      %127 = vector.load %arg12[%c3_88, %c0_89, %c0_90] : memref<4x32x8xf32, #tpu.memory_space<vmem>>, vector<1x32x8xf32>
      %128 = vector.shape_cast %127 : vector<1x32x8xf32> to vector<32x8xf32>
      %129 = vector.shape_cast %126 : vector<32x8xf32> to vector<1x32x8xf32>
      tpu.vector_store %arg12[%c3_88, %c0_89, %c0_90], %129 {strides = array<i32>} : memref<4x32x8xf32, #tpu.memory_space<vmem>>, vector<1x32x8xf32>,
    } else {
    }
    %c0 = arith.constant 0 : index
    %c0_1 = arith.constant 0 : index
    %c0_2 = arith.constant 0 : index
    %3 = vector.load %arg2[%c0, %c0_1, %c0_2] : memref<1x16x32xf32, #tpu.memory_space<vmem>>, vector<1x16x32xf32>
    %4 = vector.shape_cast %3 : vector<1x16x32xf32> to vector<16x32xf32>
    %c0_3 = arith.constant 0 : index
    %c0_4 = arith.constant 0 : index
    %5 = vector.load %arg4[%c0_3, %c0_4] : memref<32x32xf32, #tpu.memory_space<vmem>>, vector<32x32xf32>
    %cst = arith.constant dense<0.000000e+00> : vector<16x32xf32>
    %6 = tpu.matmul %4, %5, %cst {dimension_numbers = #tpu.dot_dimension_numbers<[1], [0], [0], [1], [0, 0, 1, 1], [], []>} : vector<16x32xf32>, vector<32x32xf32>, vector<16x32xf32> -> vector<16x32xf32>
    %c0_5 = arith.constant 0 : index
    %c0_6 = arith.constant 0 : index
    %7 = vector.load %arg5[%c0_5, %c0_6] : memref<1x32xf32, #tpu.memory_space<vmem>>, vector<1x32xf32>
    %8 = vector.broadcast %7 : vector<1x32xf32> to vector<16x32xf32>
    %9 = arith.addf %6, %8 : vector<16x32xf32>
    %10 = vector.extract_strided_slice %9 {offsets = [0, 0], sizes = [16, 8], strides = [1, 1]} : vector<16x32xf32> to vector<16x8xf32>
    %c0_7 = arith.constant 0 : index
    %c0_8 = arith.constant 0 : index
    %c0_9 = arith.constant 0 : index
    %11 = vector.load %arg11[%c0_7, %c0_8, %c0_9] : memref<4x32x8xf32, #tpu.memory_space<vmem>>, vector<1x32x8xf32>
    %12 = vector.shape_cast %11 : vector<1x32x8xf32> to vector<32x8xf32>
    %cst_10 = arith.constant dense<0.000000e+00> : vector<16x32xf32>
    %13 = tpu.matmul %10, %12, %cst_10 {dimension_numbers = #tpu.dot_dimension_numbers<[1], [1], [0], [0], [0, 0, 1, 0], [], []>} : vector<16x8xf32>, vector<32x8xf32>, vector<16x32xf32> -> vector<16x32xf32>
    %cst_11 = arith.constant dense<0xFF800000> : vector<16xf32>
    %14 = vector.multi_reduction <maximumf>, %13, %cst_11 [1] : vector<16x32xf32> to vector<16xf32>
    %15 = vector.shape_cast %14 : vector<16xf32> to vector<16x1xf32>
    %16 = vector.broadcast %15 : vector<16x1xf32> to vector<16x32xf32>
    %17 = arith.subf %13, %16 : vector<16x32xf32>
    %18 = math.exp %17 : vector<16x32xf32>
    %cst_12 = arith.constant dense<0.000000e+00> : vector<16xf32>
    %19 = vector.multi_reduction <add>, %18, %cst_12 [1] : vector<16x32xf32> to vector<16xf32>
    %20 = vector.shape_cast %19 : vector<16xf32> to vector<16x1xf32>
    %c0_13 = arith.constant 0 : index
    %c0_14 = arith.constant 0 : index
    %c0_15 = arith.constant 0 : index
    %21 = vector.load %arg12[%c0_13, %c0_14, %c0_15] : memref<4x32x8xf32, #tpu.memory_space<vmem>>, vector<1x32x8xf32>
    %22 = vector.shape_cast %21 : vector<1x32x8xf32> to vector<32x8xf32>
    %cst_16 = arith.constant dense<0.000000e+00> : vector<16x8xf32>
    %23 = tpu.matmul %18, %22, %cst_16 {dimension_numbers = #tpu.dot_dimension_numbers<[1], [0], [0], [1], [0, 0, 1, 1], [], []>} : vector<16x32xf32>, vector<32x8xf32>, vector<16x8xf32> -> vector<16x8xf32>
    %24 = tpu.reciprocal %20 {approx = true} : vector<16x1xf32> -> vector<16x1xf32>
    %25 = vector.broadcast %24 : vector<16x1xf32> to vector<16x8xf32>
    %26 = arith.mulf %23, %25 : vector<16x8xf32>
    %c0_17 = arith.constant 0 : index
    %c0_18 = arith.constant 0 : index
    %27 = vector.load %arg13[%c0_17, %c0_18] : memref<16x32xf32, #tpu.memory_space<vmem>>, vector<16x8xf32>
    tpu.vector_store %arg13[%c0_17, %c0_18], %26 {strides = array<i32>} : memref<16x32xf32, #tpu.memory_space<vmem>>, vector<16x8xf32>,
    %28 = vector.extract_strided_slice %9 {offsets = [0, 8], sizes = [16, 8], strides = [1, 1]} : vector<16x32xf32> to vector<16x8xf32>
    %c1 = arith.constant 1 : index
    %c0_19 = arith.constant 0 : index
    %c0_20 = arith.constant 0 : index
    %29 = vector.load %arg11[%c1, %c0_19, %c0_20] : memref<4x32x8xf32, #tpu.memory_space<vmem>>, vector<1x32x8xf32>
    %30 = vector.shape_cast %29 : vector<1x32x8xf32> to vector<32x8xf32>
    %cst_21 = arith.constant dense<0.000000e+00> : vector<16x32xf32>
    %31 = tpu.matmul %28, %30, %cst_21 {dimension_numbers = #tpu.dot_dimension_numbers<[1], [1], [0], [0], [0, 0, 1, 0], [], []>} : vector<16x8xf32>, vector<32x8xf32>, vector<16x32xf32> -> vector<16x32xf32>
    %cst_22 = arith.constant dense<0xFF800000> : vector<16xf32>
    %32 = vector.multi_reduction <maximumf>, %31, %cst_22 [1] : vector<16x32xf32> to vector<16xf32>
    %33 = vector.shape_cast %32 : vector<16xf32> to vector<16x1xf32>
    %34 = vector.broadcast %33 : vector<16x1xf32> to vector<16x32xf32>
    %35 = arith.subf %31, %34 : vector<16x32xf32>
    %36 = math.exp %35 : vector<16x32xf32>
    %cst_23 = arith.constant dense<0.000000e+00> : vector<16xf32>
    %37 = vector.multi_reduction <add>, %36, %cst_23 [1] : vector<16x32xf32> to vector<16xf32>
    %38 = vector.shape_cast %37 : vector<16xf32> to vector<16x1xf32>
    %c1_24 = arith.constant 1 : index
    %c0_25 = arith.constant 0 : index
    %c0_26 = arith.constant 0 : index
    %39 = vector.load %arg12[%c1_24, %c0_25, %c0_26] : memref<4x32x8xf32, #tpu.memory_space<vmem>>, vector<1x32x8xf32>
    %40 = vector.shape_cast %39 : vector<1x32x8xf32> to vector<32x8xf32>
    %cst_27 = arith.constant dense<0.000000e+00> : vector<16x8xf32>
    %41 = tpu.matmul %36, %40, %cst_27 {dimension_numbers = #tpu.dot_dimension_numbers<[1], [0], [0], [1], [0, 0, 1, 1], [], []>} : vector<16x32xf32>, vector<32x8xf32>, vector<16x8xf32> -> vector<16x8xf32>
    %42 = tpu.reciprocal %38 {approx = true} : vector<16x1xf32> -> vector<16x1xf32>
    %43 = vector.broadcast %42 : vector<16x1xf32> to vector<16x8xf32>
    %44 = arith.mulf %41, %43 : vector<16x8xf32>
    %c0_28 = arith.constant 0 : index
    %c8 = arith.constant 8 : index
    %45 = vector.load %arg13[%c0_28, %c8] : memref<16x32xf32, #tpu.memory_space<vmem>>, vector<16x8xf32>
    tpu.vector_store %arg13[%c0_28, %c8], %44 {strides = array<i32>} : memref<16x32xf32, #tpu.memory_space<vmem>>, vector<16x8xf32>,
    %46 = vector.extract_strided_slice %9 {offsets = [0, 16], sizes = [16, 8], strides = [1, 1]} : vector<16x32xf32> to vector<16x8xf32>
    %c2 = arith.constant 2 : index
    %c0_29 = arith.constant 0 : index
    %c0_30 = arith.constant 0 : index
    %47 = vector.load %arg11[%c2, %c0_29, %c0_30] : memref<4x32x8xf32, #tpu.memory_space<vmem>>, vector<1x32x8xf32>
    %48 = vector.shape_cast %47 : vector<1x32x8xf32> to vector<32x8xf32>
    %cst_31 = arith.constant dense<0.000000e+00> : vector<16x32xf32>
    %49 = tpu.matmul %46, %48, %cst_31 {dimension_numbers = #tpu.dot_dimension_numbers<[1], [1], [0], [0], [0, 0, 1, 0], [], []>} : vector<16x8xf32>, vector<32x8xf32>, vector<16x32xf32> -> vector<16x32xf32>
    %cst_32 = arith.constant dense<0xFF800000> : vector<16xf32>
    %50 = vector.multi_reduction <maximumf>, %49, %cst_32 [1] : vector<16x32xf32> to vector<16xf32>
    %51 = vector.shape_cast %50 : vector<16xf32> to vector<16x1xf32>
    %52 = vector.broadcast %51 : vector<16x1xf32> to vector<16x32xf32>
    %53 = arith.subf %49, %52 : vector<16x32xf32>
    %54 = math.exp %53 : vector<16x32xf32>
    %cst_33 = arith.constant dense<0.000000e+00> : vector<16xf32>
    %55 = vector.multi_reduction <add>, %54, %cst_33 [1] : vector<16x32xf32> to vector<16xf32>
    %56 = vector.shape_cast %55 : vector<16xf32> to vector<16x1xf32>
    %c2_34 = arith.constant 2 : index
    %c0_35 = arith.constant 0 : index
    %c0_36 = arith.constant 0 : index
    %57 = vector.load %arg12[%c2_34, %c0_35, %c0_36] : memref<4x32x8xf32, #tpu.memory_space<vmem>>, vector<1x32x8xf32>
    %58 = vector.shape_cast %57 : vector<1x32x8xf32> to vector<32x8xf32>
    %cst_37 = arith.constant dense<0.000000e+00> : vector<16x8xf32>
    %59 = tpu.matmul %54, %58, %cst_37 {dimension_numbers = #tpu.dot_dimension_numbers<[1], [0], [0], [1], [0, 0, 1, 1], [], []>} : vector<16x32xf32>, vector<32x8xf32>, vector<16x8xf32> -> vector<16x8xf32>
    %60 = tpu.reciprocal %56 {approx = true} : vector<16x1xf32> -> vector<16x1xf32>
    %61 = vector.broadcast %60 : vector<16x1xf32> to vector<16x8xf32>
    %62 = arith.mulf %59, %61 : vector<16x8xf32>
    %c0_38 = arith.constant 0 : index
    %c16 = arith.constant 16 : index
    %63 = vector.load %arg13[%c0_38, %c16] : memref<16x32xf32, #tpu.memory_space<vmem>>, vector<16x8xf32>
    tpu.vector_store %arg13[%c0_38, %c16], %62 {strides = array<i32>} : memref<16x32xf32, #tpu.memory_space<vmem>>, vector<16x8xf32>,
    %64 = vector.extract_strided_slice %9 {offsets = [0, 24], sizes = [16, 8], strides = [1, 1]} : vector<16x32xf32> to vector<16x8xf32>
    %c3 = arith.constant 3 : index
    %c0_39 = arith.constant 0 : index
    %c0_40 = arith.constant 0 : index
    %65 = vector.load %arg11[%c3, %c0_39, %c0_40] : memref<4x32x8xf32, #tpu.memory_space<vmem>>, vector<1x32x8xf32>
    %66 = vector.shape_cast %65 : vector<1x32x8xf32> to vector<32x8xf32>
    %cst_41 = arith.constant dense<0.000000e+00> : vector<16x32xf32>
    %67 = tpu.matmul %64, %66, %cst_41 {dimension_numbers = #tpu.dot_dimension_numbers<[1], [1], [0], [0], [0, 0, 1, 0], [], []>} : vector<16x8xf32>, vector<32x8xf32>, vector<16x32xf32> -> vector<16x32xf32>
    %cst_42 = arith.constant dense<0xFF800000> : vector<16xf32>
    %68 = vector.multi_reduction <maximumf>, %67, %cst_42 [1] : vector<16x32xf32> to vector<16xf32>
    %69 = vector.shape_cast %68 : vector<16xf32> to vector<16x1xf32>
    %70 = vector.broadcast %69 : vector<16x1xf32> to vector<16x32xf32>
    %71 = arith.subf %67, %70 : vector<16x32xf32>
    %72 = math.exp %71 : vector<16x32xf32>
    %cst_43 = arith.constant dense<0.000000e+00> : vector<16xf32>
    %73 = vector.multi_reduction <add>, %72, %cst_43 [1] : vector<16x32xf32> to vector<16xf32>
    %74 = vector.shape_cast %73 : vector<16xf32> to vector<16x1xf32>
    %c3_44 = arith.constant 3 : index
    %c0_45 = arith.constant 0 : index
    %c0_46 = arith.constant 0 : index
    %75 = vector.load %arg12[%c3_44, %c0_45, %c0_46] : memref<4x32x8xf32, #tpu.memory_space<vmem>>, vector<1x32x8xf32>
    %76 = vector.shape_cast %75 : vector<1x32x8xf32> to vector<32x8xf32>
    %cst_47 = arith.constant dense<0.000000e+00> : vector<16x8xf32>
    %77 = tpu.matmul %72, %76, %cst_47 {dimension_numbers = #tpu.dot_dimension_numbers<[1], [0], [0], [1], [0, 0, 1, 1], [], []>} : vector<16x32xf32>, vector<32x8xf32>, vector<16x8xf32> -> vector<16x8xf32>
    %78 = tpu.reciprocal %74 {approx = true} : vector<16x1xf32> -> vector<16x1xf32>
    %79 = vector.broadcast %78 : vector<16x1xf32> to vector<16x8xf32>
    %80 = arith.mulf %77, %79 : vector<16x8xf32>
    %c0_48 = arith.constant 0 : index
    %c24 = arith.constant 24 : index
    %81 = vector.load %arg13[%c0_48, %c24] : memref<16x32xf32, #tpu.memory_space<vmem>>, vector<16x8xf32>
    tpu.vector_store %arg13[%c0_48, %c24], %80 {strides = array<i32>} : memref<16x32xf32, #tpu.memory_space<vmem>>, vector<16x8xf32>,
    %c0_49 = arith.constant 0 : index
    %c0_50 = arith.constant 0 : index
    %82 = vector.load %arg13[%c0_49, %c0_50] : memref<16x32xf32, #tpu.memory_space<vmem>>, vector<16x32xf32>
    %c0_51 = arith.constant 0 : index
    %c0_52 = arith.constant 0 : index
    %83 = vector.load %arg8[%c0_51, %c0_52] : memref<32x32xf32, #tpu.memory_space<vmem>>, vector<32x32xf32>
    %cst_53 = arith.constant dense<0.000000e+00> : vector<16x32xf32>
    %84 = tpu.matmul %82, %83, %cst_53 {dimension_numbers = #tpu.dot_dimension_numbers<[1], [0], [0], [1], [0, 0, 1, 1], [], []>} : vector<16x32xf32>, vector<32x32xf32>, vector<16x32xf32> -> vector<16x32xf32>
    %c0_54 = arith.constant 0 : index
    %c0_55 = arith.constant 0 : index
    %85 = vector.load %arg9[%c0_54, %c0_55] : memref<1x32xf32, #tpu.memory_space<vmem>>, vector<1x32xf32>
    %86 = vector.broadcast %85 : vector<1x32xf32> to vector<16x32xf32>
    %87 = arith.addf %84, %86 : vector<16x32xf32>
    %c0_56 = arith.constant 0 : index
    %c0_57 = arith.constant 0 : index
    %c0_58 = arith.constant 0 : index
    %88 = vector.load %arg10[%c0_56, %c0_57, %c0_58] : memref<1x16x32xf32, #tpu.memory_space<vmem>>, vector<1x16x32xf32>
    %89 = vector.shape_cast %88 : vector<1x16x32xf32> to vector<16x32xf32>
    %90 = vector.shape_cast %87 : vector<16x32xf32> to vector<1x16x32xf32>
    tpu.vector_store %arg10[%c0_56, %c0_57, %c0_58], %90 {strides = array<i32>} : memref<1x16x32xf32, #tpu.memory_space<vmem>>, vector<1x16x32xf32>,
    return
  }
  func.func @transform_0(%arg0: i32, %arg1: i32) -> (i32, i32, i32) {
    %c0_i32 = arith.constant 0 : i32
    %c0_i32_0 = arith.constant 0 : i32
    return %arg0, %arg1, %c0_i32 : i32, i32, i32
  }
  func.func @transform_1(%arg0: i32, %arg1: i32) -> (i32, i32, i32) {
    %c0_i32 = arith.constant 0 : i32
    %c0_i32_0 = arith.constant 0 : i32
    %c0_i32_1 = arith.constant 0 : i32
    return %arg0, %c0_i32, %c0_i32_0 : i32, i32, i32
  }
  func.func @transform_2(%arg0: i32, %arg1: i32) -> (i32, i32) {
    %c0_i32 = arith.constant 0 : i32
    %c0_i32_0 = arith.constant 0 : i32
    %c0_i32_1 = arith.constant 0 : i32
    return %c0_i32, %c0_i32_0 : i32, i32
  }
  func.func @transform_3(%arg0: i32, %arg1: i32) -> (i32, i32) {
    %c0_i32 = arith.constant 0 : i32
    %c0_i32_0 = arith.constant 0 : i32
    %c0_i32_1 = arith.constant 0 : i32
    return %c0_i32, %c0_i32_0 : i32, i32
  }
  func.func @transform_4(%arg0: i32, %arg1: i32) -> (i32, i32) {
    %c0_i32 = arith.constant 0 : i32
    %c0_i32_0 = arith.constant 0 : i32
    %c0_i32_1 = arith.constant 0 : i32
    return %c0_i32, %c0_i32_0 : i32, i32
  }
  func.func @transform_5(%arg0: i32, %arg1: i32) -> (i32, i32) {
    %c0_i32 = arith.constant 0 : i32
    %c0_i32_0 = arith.constant 0 : i32
    %c0_i32_1 = arith.constant 0 : i32
    return %c0_i32, %c0_i32_0 : i32, i32
  }
  func.func @transform_6(%arg0: i32, %arg1: i32) -> (i32, i32) {
    %c0_i32 = arith.constant 0 : i32
    %c0_i32_0 = arith.constant 0 : i32
    %c0_i32_1 = arith.constant 0 : i32
    return %c0_i32, %c0_i32_0 : i32, i32
  }
  func.func @transform_7(%arg0: i32, %arg1: i32) -> (i32, i32) {
    %c0_i32 = arith.constant 0 : i32
    %c0_i32_0 = arith.constant 0 : i32
    %c0_i32_1 = arith.constant 0 : i32
    return %c0_i32, %c0_i32_0 : i32, i32
  }
  func.func @transform_8(%arg0: i32, %arg1: i32) -> (i32, i32, i32) {
    %c0_i32 = arith.constant 0 : i32
    %c0_i32_0 = arith.constant 0 : i32
    return %arg0, %arg1, %c0_i32 : i32, i32, i32
  }
}

</mosaic_0001>

<llo_original>
// kernel: tpu_custom_call.1
$region0: #{tpu_custom_call.1}
  #allocation0 [shape = 'u32[]', space=smem, size = 0x4, offset = 0x4, fixed_abs, tag = 'smem constant byte address 0x4 - core index']
  #allocation1 [shape = 'u32[144,128]{1,0:T(1,128)}', space=vmem, size = 0x12000, scoped, tag = 'internal scratch']
  #allocation2 [shape = 'f32[4,32,8]{2,1,0:T(8,128)}', space=vmem, size = 0x10000, scoped, tag = 'scratch operand']
  #allocation3 [shape = 'f32[4,32,8]{2,1,0:T(8,128)}', space=vmem, size = 0x10000, scoped, tag = 'scratch operand']
  #allocation4 [shape = 'f32[16,32]{1,0:T(8,128)}', space=vmem, size = 0x2000, scoped, tag = 'scratch operand']
  %s0 = inlined_call_operand.vmem [shape: f32[2,16,32], index: 0, kind: input, shape index: {}]
  %s1 = inlined_call_operand.vmem [shape: f32[2,32,16], index: 1, kind: input, shape index: {}]
  %s2 = inlined_call_operand.vmem [shape: f32[32,32], index: 2, kind: input, shape index: {}]
  %s3 = inlined_call_operand.vmem [shape: f32[1,32], index: 3, kind: input, shape index: {}]
  %s4 = inlined_call_operand.hbm [shape: f32[16,64], index: 4, kind: input, shape index: {}]
  %s5 = inlined_call_operand.vmem [shape: f32[1,64], index: 5, kind: input, shape index: {}]
  %s6 = inlined_call_operand.vmem [shape: f32[32,32], index: 6, kind: input, shape index: {}]
  %s7 = inlined_call_operand.vmem [shape: f32[1,32], index: 7, kind: input, shape index: {}]
  %s8 = inlined_call_operand.hbm [shape: f32[2,16,32], index: 8, kind: output, shape index: {}]
  %s9 = sld [smem:[#allocation0]]
  $region73: #{tpu_custom_call.1} parent=0
    _
  %s11 = ssub.s32 1, %s9
  %s12 = scalar_select 0, %s11, %s9
  $region1: #{tpu_custom_call.1} parent=0
    #allocation5 [shape = 'u8[8192]{0}', space=vmem, size = 0x2000, scoped, tag = 'input window, operand 4, single buffered']
    #allocation6 [shape = 's32[2]{0}', space=sflag, size = 0x8, scoped, tag = 'scoped memory for tpu_custom_call.1']
    #allocation7 [shape = 's32[2]{0}', space=sflag, size = 0x8, scoped, tag = 'scoped memory for tpu_custom_call.1']
    #allocation8 [shape = 'u8[16384]{0}', space=vmem, size = 0x4000, scoped, tag = 'output window, operand 0']
    %13 = vsyncpa [#allocation6], 0
    %14 = vsyncpa [#allocation7], 0
    %s15 = scalar_lea.sflag [#allocation7], 1
    %16 = vsyncpa %s15, 0
    loop: start=0, step=1, limit=4
    $region2: #{tpu_custom_call.1} parent=1 // loop_pre_header
      _
    $region3: #{tpu_custom_call.1} parent=1 // loop_header
      %s18 = sphi 0, %s22
      %p19 = scmp.ge.s32.totalorder %s18, 4
      %s25 = sphi 0, %s37
      %s26 = sphi 0, %s33
      %s27 = sphi 0, %s25
      %s28 = sphi 0, %s26
      %s29 = sphi 0, %s27
      %s30 = sphi 0, %s28
      %s42 = sphi 0, %s44
      %s45 = sphi 0, %s42
      %s46 = sphi 0, %s45
      %s62 = sphi 0, %s46
      %s68 = sphi 0, %s70
      %s71 = sphi 0, %s68
      %s72 = sphi 0, %s71
      %s88 = sphi 0, %s72
      %s92 = sphi 0, %s92
      %s94 = sphi 0, %s92
      %s95 = sphi 0, %s94
      %s109 = sphi 0, %s95
      %s113 = sphi 0, %s113
      %s115 = sphi 0, %s113
      %s116 = sphi 0, %s115
      %s130 = sphi 0, %s116
      %s134 = sphi 0, %s134
      %s136 = sphi 0, %s134
      %s137 = sphi 0, %s136
      %s151 = sphi 0, %s137
      %s155 = sphi 0, %s155
      %s157 = sphi 0, %s155
      %s158 = sphi 0, %s157
      %s172 = sphi 0, %s158
      %s176 = sphi 0, %s176
      %s178 = sphi 0, %s176
      %s179 = sphi 0, %s178
      %s193 = sphi 0, %s179
      %s197 = sphi 0, %s197
      %s199 = sphi 0, %s197
      %s200 = sphi 0, %s199
      %s214 = sphi 0, %s200
      %s222 = sphi 0, %s224
      %s225 = sphi 0, %s222
      %s226 = sphi 0, %s225
      %s242 = sphi 0, %s226
    $region4: #{tpu_custom_call.1} parent=1 // loop_header_branch
      %21 = sbr.rel (%p19) target = $region8
    $region5: #{tpu_custom_call.1} parent=1 // loop_body
      %s23 = ssub.s32 %s18, 1
      %s24 = ssub.s32 %s18, 2
      %s31 = sadd.s32 1, %s26
      %p32 = scmp.ge.s32.totalorder %s31, 1
      %s33 = scalar_select %p32, 0, %s31
      %s34 = sadd.s32 1, %s25
      %s35 = scalar_select %p32, %s34, %s25
      %p36 = scmp.ge.s32.totalorder %s35, 2
      %s37 = scalar_select %p36, 0, %s35
      %s38 = ssub.s32 %s25, %s37
      %s39 = ssub.s32 %s26, %s33
      %s40 = sor.u32 %s38, %s39
      %p41 = scmp.eq.s32.totalorder %s40, 0
      %s43 = sadd.s32 %s42, 1
      %s44 = scalar_select %p41, %s42, %s43
      %p47 = pneg %p41
      %p48 = scmp.eq.s32.totalorder %s18, 1
      %p49 = por %p47, %p48
      %p50 = scmp.ne.s32.totalorder %s42, %s45
      %p51 = scmp.eq.s32.totalorder %s18, 0
      %p52 = por %p50, %p51
      %p53 = scmp.ne.s32.totalorder %s42, %s45
      %p54 = scmp.eq.s32.totalorder %s23, 1
      %p55 = por %p53, %p54
      %p56 = scmp.ne.s32.totalorder %s45, %s46
      %p57 = scmp.eq.s32.totalorder %s23, 0
      %p58 = por %p56, %p57
      %p59 = scmp.ne.s32.totalorder %s45, %s46
      %p60 = scmp.eq.s32.totalorder %s24, 1
      %p61 = por %p59, %p60
      %p63 = scmp.ne.s32.totalorder %s46, %s62
      %p64 = scmp.eq.s32.totalorder %s24, 0
      %p65 = por %p63, %p64
      %s66 = ssub.s32 %s25, %s37
      %p67 = scmp.eq.s32.totalorder %s66, 0
      %s69 = sadd.s32 %s68, 1
      %s70 = scalar_select %p67, %s68, %s69
      %p73 = pneg %p67
      %p74 = scmp.eq.s32.totalorder %s18, 1
      %p75 = por %p73, %p74
      %p76 = scmp.ne.s32.totalorder %s68, %s71
      %p77 = scmp.eq.s32.totalorder %s18, 0
      %p78 = por %p76, %p77
      %p79 = scmp.ne.s32.totalorder %s68, %s71
      %p80 = scmp.eq.s32.totalorder %s23, 1
      %p81 = por %p79, %p80
      %p82 = scmp.ne.s32.totalorder %s71, %s72
      %p83 = scmp.eq.s32.totalorder %s23, 0
      %p84 = por %p82, %p83
      %p85 = scmp.ne.s32.totalorder %s71, %s72
      %p86 = scmp.eq.s32.totalorder %s24, 1
      %p87 = por %p85, %p86
      %p89 = scmp.ne.s32.totalorder %s72, %s88
      %p90 = scmp.eq.s32.totalorder %s24, 0
      %p91 = por %p89, %p90
      %s93 = sadd.s32 %s92, 1
      %p96 = scmp.eq.s32.totalorder %s18, 1
      %p97 = scmp.ne.s32.totalorder %s92, %s94
      %p98 = scmp.eq.s32.totalorder %s18, 0
      %p99 = por %p97, %p98
      %p100 = scmp.ne.s32.totalorder %s92, %s94
      %p101 = scmp.eq.s32.totalorder %s23, 1
      %p102 = por %p100, %p101
      %p103 = scmp.ne.s32.totalorder %s94, %s95
      %p104 = scmp.eq.s32.totalorder %s23, 0
      %p105 = por %p103, %p104
      %p106 = scmp.ne.s32.totalorder %s94, %s95
      %p107 = scmp.eq.s32.totalorder %s24, 1
      %p108 = por %p106, %p107
      %p110 = scmp.ne.s32.totalorder %s95, %s109
      %p111 = scmp.eq.s32.totalorder %s24, 0
      %p112 = por %p110, %p111
      %s114 = sadd.s32 %s113, 1
      %p117 = scmp.eq.s32.totalorder %s18, 1
      %p118 = scmp.ne.s32.totalorder %s113, %s115
      %p119 = scmp.eq.s32.totalorder %s18, 0
      %p120 = por %p118, %p119
      %p121 = scmp.ne.s32.totalorder %s113, %s115
      %p122 = scmp.eq.s32.totalorder %s23, 1
      %p123 = por %p121, %p122
      %p124 = scmp.ne.s32.totalorder %s115, %s116
      %p125 = scmp.eq.s32.totalorder %s23, 0
      %p126 = por %p124, %p125
      %p127 = scmp.ne.s32.totalorder %s115, %s116
      %p128 = scmp.eq.s32.totalorder %s24, 1
      %p129 = por %p127, %p128
      %p131 = scmp.ne.s32.totalorder %s116, %s130
      %p132 = scmp.eq.s32.totalorder %s24, 0
      %p133 = por %p131, %p132
      %s135 = sadd.s32 %s134, 1
      %p138 = scmp.eq.s32.totalorder %s18, 1
      %p139 = scmp.ne.s32.totalorder %s134, %s136
      %p140 = scmp.eq.s32.totalorder %s18, 0
      %p141 = por %p139, %p140
      %p142 = scmp.ne.s32.totalorder %s134, %s136
      %p143 = scmp.eq.s32.totalorder %s23, 1
      %p144 = por %p142, %p143
      %p145 = scmp.ne.s32.totalorder %s136, %s137
      %p146 = scmp.eq.s32.totalorder %s23, 0
      %p147 = por %p145, %p146
      %p148 = scmp.ne.s32.totalorder %s136, %s137
      %p149 = scmp.eq.s32.totalorder %s24, 1
      %p150 = por %p148, %p149
      %p152 = scmp.ne.s32.totalorder %s137, %s151
      %p153 = scmp.eq.s32.totalorder %s24, 0
      %p154 = por %p152, %p153
      %s156 = sadd.s32 %s155, 1
      %p159 = scmp.eq.s32.totalorder %s18, 1
      %p160 = scmp.ne.s32.totalorder %s155, %s157
      %p161 = scmp.eq.s32.totalorder %s18, 0
      %p162 = por %p160, %p161
      %p163 = scmp.ne.s32.totalorder %s155, %s157
      %p164 = scmp.eq.s32.totalorder %s23, 1
      %p165 = por %p163, %p164
      %p166 = scmp.ne.s32.totalorder %s157, %s158
      %p167 = scmp.eq.s32.totalorder %s23, 0
      %p168 = por %p166, %p167
      %p169 = scmp.ne.s32.totalorder %s157, %s158
      %p170 = scmp.eq.s32.totalorder %s24, 1
      %p171 = por %p169, %p170
      %p173 = scmp.ne.s32.totalorder %s158, %s172
      %p174 = scmp.eq.s32.totalorder %s24, 0
      %p175 = por %p173, %p174
      %s177 = sadd.s32 %s176, 1
      %p180 = scmp.eq.s32.totalorder %s18, 1
      %p181 = scmp.ne.s32.totalorder %s176, %s178
      %p182 = scmp.eq.s32.totalorder %s18, 0
      %p183 = por %p181, %p182
      %p184 = scmp.ne.s32.totalorder %s176, %s178
      %p185 = scmp.eq.s32.totalorder %s23, 1
      %p186 = por %p184, %p185
      %p187 = scmp.ne.s32.totalorder %s178, %s179
      %p188 = scmp.eq.s32.totalorder %s23, 0
      %p189 = por %p187, %p188
      %p190 = scmp.ne.s32.totalorder %s178, %s179
      %p191 = scmp.eq.s32.totalorder %s24, 1
      %p192 = por %p190, %p191
      %p194 = scmp.ne.s32.totalorder %s179, %s193
      %p195 = scmp.eq.s32.totalorder %s24, 0
      %p196 = por %p194, %p195
      %s198 = sadd.s32 %s197, 1
      %p201 = scmp.eq.s32.totalorder %s18, 1
      %p202 = scmp.ne.s32.totalorder %s197, %s199
      %p203 = scmp.eq.s32.totalorder %s18, 0
      %p204 = por %p202, %p203
      %p205 = scmp.ne.s32.totalorder %s197, %s199
      %p206 = scmp.eq.s32.totalorder %s23, 1
      %p207 = por %p205, %p206
      %p208 = scmp.ne.s32.totalorder %s199, %s200
      %p209 = scmp.eq.s32.totalorder %s23, 0
      %p210 = por %p208, %p209
      %p211 = scmp.ne.s32.totalorder %s199, %s200
      %p212 = scmp.eq.s32.totalorder %s24, 1
      %p213 = por %p211, %p212
      %p215 = scmp.ne.s32.totalorder %s200, %s214
      %p216 = scmp.eq.s32.totalorder %s24, 0
      %p217 = por %p215, %p216
      %s218 = ssub.s32 %s25, %s37
      %s219 = ssub.s32 %s26, %s33
      %s220 = sor.u32 %s218, %s219
      %p221 = scmp.eq.s32.totalorder %s220, 0
      %s223 = sadd.s32 %s222, 1
      %s224 = scalar_select %p221, %s222, %s223
      %p227 = pneg %p221
      %p228 = scmp.eq.s32.totalorder %s18, 1
      %p229 = por %p227, %p228
      %p230 = scmp.ne.s32.totalorder %s222, %s225
      %p231 = scmp.eq.s32.totalorder %s18, 0
      %p232 = por %p230, %p231
      %p233 = scmp.ne.s32.totalorder %s222, %s225
      %p234 = scmp.eq.s32.totalorder %s23, 1
      %p235 = por %p233, %p234
      %p236 = scmp.ne.s32.totalorder %s225, %s226
      %p237 = scmp.eq.s32.totalorder %s23, 0
      %p238 = por %p236, %p237
      %p239 = scmp.ne.s32.totalorder %s225, %s226
      %p240 = scmp.eq.s32.totalorder %s24, 1
      %p241 = por %p239, %p240
      %p243 = scmp.ne.s32.totalorder %s226, %s242
      %p244 = scmp.eq.s32.totalorder %s24, 0
      %p245 = por %p243, %p244
      %p246 = scmp.le.s32.totalorder 1, %s18
      %p247 = scmp.lt.s32.totalorder %s18, 3
      %p248 = pnand %p246, %p247
      %p249 = pneg %p248
      // Predicated region
      $region9: #{tpu_custom_call.1} parent=5 // pred_check
        _
      $region10: #{tpu_custom_call.1} parent=5 // pred_check_branch
        %251 = sbr.rel (%p248) target = $region12
      $region11: #{tpu_custom_call.1} parent=5 // pred_region
        %s252 = ssub.s32 %s18, 1
        // Predicated region
        $region13: #{tpu_custom_call.1} parent=11 // pred_check
          %p253 = pneg %p105
        $region14: #{tpu_custom_call.1} parent=11 // pred_check_branch
          %255 = sbr.rel (%p253) target = $region16
        $region15: #{tpu_custom_call.1} parent=11 // pred_region
          _
        $region16: #{tpu_custom_call.1} parent=11 // pred_fallthru
          _
        // Predicated region
        $region17: #{tpu_custom_call.1} parent=11 // pred_check
          %p256 = pneg %p126
        $region18: #{tpu_custom_call.1} parent=11 // pred_check_branch
          %258 = sbr.rel (%p256) target = $region20
        $region19: #{tpu_custom_call.1} parent=11 // pred_region
          _
        $region20: #{tpu_custom_call.1} parent=11 // pred_fallthru
          _
        // Predicated region
        $region21: #{tpu_custom_call.1} parent=11 // pred_check
          %p259 = pneg %p147
        $region22: #{tpu_custom_call.1} parent=11 // pred_check_branch
          %261 = sbr.rel (%p259) target = $region24
        $region23: #{tpu_custom_call.1} parent=11 // pred_region
          %s263 = ssub.s32 256, 256
          %264 = vsyncadd [#allocation6], %s263
          %s265 = sshll.u32 [#allocation5], 4
          %s266 = int_to_ptr.vmem [resolvable:$true] %s265
          %271 = dma.hbm_to_vmem [thread:$0]  %s4, 256, %s266, [#allocation6], 128, 128, 8
        $region24: #{tpu_custom_call.1} parent=11 // pred_fallthru
          _
        // Predicated region
        $region25: #{tpu_custom_call.1} parent=11 // pred_check
          %p272 = pneg %p168
        $region26: #{tpu_custom_call.1} parent=11 // pred_check_branch
          %274 = sbr.rel (%p272) target = $region28
        $region27: #{tpu_custom_call.1} parent=11 // pred_region
          _
        $region28: #{tpu_custom_call.1} parent=11 // pred_fallthru
          _
        // Predicated region
        $region29: #{tpu_custom_call.1} parent=11 // pred_check
          %p275 = pneg %p189
        $region30: #{tpu_custom_call.1} parent=11 // pred_check_branch
          %277 = sbr.rel (%p275) target = $region32
        $region31: #{tpu_custom_call.1} parent=11 // pred_region
          _
        $region32: #{tpu_custom_call.1} parent=11 // pred_fallthru
          _
        // Predicated region
        $region33: #{tpu_custom_call.1} parent=11 // pred_check
          %p278 = pneg %p210
        $region34: #{tpu_custom_call.1} parent=11 // pred_check_branch
          %280 = sbr.rel (%p278) target = $region36
        $region35: #{tpu_custom_call.1} parent=11 // pred_region
          _
        $region36: #{tpu_custom_call.1} parent=11 // pred_fallthru
          _
      $region12: #{tpu_custom_call.1} parent=5 // pred_fallthru
        _
      %p281 = scmp.lt.s32.totalorder %s18, 2
      // Predicated region
      $region37: #{tpu_custom_call.1} parent=5 // pred_check
        %p282 = pneg %p281
      $region38: #{tpu_custom_call.1} parent=5 // pred_check_branch
        %284 = sbr.rel (%p282) target = $region40
      $region39: #{tpu_custom_call.1} parent=5 // pred_region
        // Predicated region
        $region41: #{tpu_custom_call.1} parent=39 // pred_check
          %p285 = pneg %p52
        $region42: #{tpu_custom_call.1} parent=39 // pred_check_branch
          %287 = sbr.rel (%p285) target = $region44
        $region43: #{tpu_custom_call.1} parent=39 // pred_region
          %s288 = smul.u32 2, %s26
          %p289 = scmp.lt.s32.totalorder %s25, 1
          %s290 = scalar_select %p289, %s25, 1
          %p291 = scmp.lt.s32.totalorder %s288, 1
          %s292 = scalar_select %p291, %s288, 1
          %s293 = smul.addr %s290, 2
          %s294 = sadd.s32 %s292, %s293
          %s295 = smul.addr %s294, 8
          %s296 = scalar_lea.vmem %s0, %s295
          %s297 = smul.u32 2, %s26
        $region44: #{tpu_custom_call.1} parent=39 // pred_fallthru
          _
        // Predicated region
        $region45: #{tpu_custom_call.1} parent=39 // pred_check
          %p298 = pneg %p78
        $region46: #{tpu_custom_call.1} parent=39 // pred_check_branch
          %300 = sbr.rel (%p298) target = $region48
        $region47: #{tpu_custom_call.1} parent=39 // pred_region
          %p301 = scmp.lt.s32.totalorder %s25, 1
          %s302 = scalar_select %p301, %s25, 1
          %s303 = smul.addr %s302, 4
          %s304 = smul.addr %s303, 8
          %s305 = scalar_lea.vmem %s1, %s304
        $region48: #{tpu_custom_call.1} parent=39 // pred_fallthru
          _
      $region40: #{tpu_custom_call.1} parent=5 // pred_fallthru
        _
      %p306 = scmp.le.s32.totalorder 1, %s18
      %p307 = scmp.lt.s32.totalorder %s18, 3
      %p308 = pnand %p306, %p307
      %p309 = pneg %p308
      // Predicated region
      $region49: #{tpu_custom_call.1} parent=5 // pred_check
        _
      $region50: #{tpu_custom_call.1} parent=5 // pred_check_branch
        %311 = sbr.rel (%p308) target = $region52
      $region51: #{tpu_custom_call.1} parent=5 // pred_region
        %s312 = ssub.s32 %s18, 1
        // Predicated region
        $region53: #{tpu_custom_call.1} parent=51 // pred_check
          %p313 = pneg %p147
        $region54: #{tpu_custom_call.1} parent=51 // pred_check_branch
          %315 = sbr.rel (%p313) target = $region56
        $region55: #{tpu_custom_call.1} parent=51 // pred_region
          %316 = dma.done [#allocation6], 256
        $region56: #{tpu_custom_call.1} parent=51 // pred_fallthru
          _
        %s317 = smul.u32 2, %s28
        %p318 = scmp.lt.s32.totalorder %s27, 1
        %s319 = scalar_select %p318, %s27, 1
        %p320 = scmp.lt.s32.totalorder %s317, 1
        %s321 = scalar_select %p320, %s317, 1
        %s322 = smul.addr %s319, 2
        %s323 = sadd.s32 %s321, %s322
        %s324 = smul.addr %s323, 8
        %s325 = scalar_lea.vmem %s0, %s324
        %p326 = pneg %p58
        %p327 = pneg %p55
        %p328 = scmp.lt.s32.totalorder %s27, 1
        %s329 = scalar_select %p328, %s27, 1
        %s330 = smul.addr %s329, 4
        %s331 = smul.addr %s330, 8
        %s332 = scalar_lea.vmem %s1, %s331
        %p333 = pneg %p84
        %p334 = pneg %p81
        %p335 = pneg %p105
        %p336 = pneg %p102
        %p337 = pneg %p126
        %p338 = pneg %p123
        %p339 = pneg %p147
        %p340 = pneg %p144
        %p341 = pneg %p168
        %p342 = pneg %p165
        %p343 = pneg %p189
        %p344 = pneg %p186
        %p345 = pneg %p210
        %p346 = pneg %p207
        %p347 = pneg %p238
        %p348 = pneg %p235
        %s349 = sand.u32 %s225, 1
        %s350 = scalar_lea.sflag [#allocation7], %s349
        %s351 = sand.u32 %s225, 1
        %s352 = smul.addr %s351, 16
        %s353 = scalar_lea.vmem [#allocation8], %s352
        %s354 = smul.u32 2, %s28
        %p355 = scmp.lt.s32.totalorder %s27, 1
        %s356 = scalar_select %p355, %s27, 1
        %p357 = scmp.lt.s32.totalorder %s354, 1
        %s358 = scalar_select %p357, %s354, 1
        %s359 = smul.addr %s356, 2
        %s360 = sadd.s32 %s358, %s359
        %s361 = smul.addr %s360, 8
        %s362 = scalar_lea.vmem %s0, %s361
        %s363 = smul.u32 2, %s28
        %p364 = scmp.lt.s32.totalorder %s27, 1
        %s365 = scalar_select %p364, %s27, 1
        %s366 = smul.addr %s365, 4
        %s367 = smul.addr %s366, 8
        %s368 = scalar_lea.vmem %s1, %s367
        %s369 = smul.u32 2, %s28
        %p370 = scmp.eq.s32.totalorder %s28, 0
        // Predicated region
        $region57: #{tpu_custom_call.1} parent=51 // pred_check
          %p371 = pneg %p370
        $region58: #{tpu_custom_call.1} parent=51 // pred_check_branch
          %373 = sbr.rel (%p371) target = $region60
        $region59: #{tpu_custom_call.1} parent=51 // pred_region
          %v374 = vld [vmem:[%s368] sm:$0xff]
          %v375 = vld [vmem:[%s368 + $0x8] sm:$0xff]
          %v376 = vld [vmem:[%s368 + $0x10] sm:$0xff]
          %v377 = vld [vmem:[%s368 + $0x18] sm:$0xff]
          %v378 = vld [vmem:[#allocation5] sm:$0xff]
          %v379 = vld [vmem:[#allocation5 + $0x8] sm:$0xff]
          %v380 = vld [vmem:[%s5] sm:$0x1]
          %v382 = vlaneseq
          %v383 = vshrl.u32 %v382, 7
          %v384 = vsub.s32 0, %v383
          %v385 = vrot.slane %v380, %v384
          %vm387 = vcmask 130048
          %v389 = vsel %vm387, %v374, 0
          %v392 = vsel %vm387, %v375, 0
          %v395 = vsel %vm387, %v376, 0
          %v398 = vsel %vm387, %v377, 0
          %400 = vmatprep.subr.mxu0 0.0
          %401 = vmatpush1.msra.mxu0 0.0
          %402 = vmatprep.subr.mxu0 0.0
          %403 = vmatpush1.msra.mxu0 0.0
          %404 = vmatprep.subr.mxu0 0.0
          %405 = vmatpush1.msra.mxu0 0.0
          %406 = vmatprep.subr.mxu0 0.0
          %407 = vmatpush1.msra.mxu0 0.0
          %408 = vmatprep.subr.mxu0 0.0
          %409 = vmatpush1.msra.mxu0 0.0
          %410 = vmatprep.subr.mxu0 0.0
          %411 = vmatpush1.msra.mxu0 0.0
          %412 = vmatprep.subr.mxu0 0.0
          %413 = vmatpush1.msra.mxu0 0.0
          %414 = vmatprep.subr.mxu0 0.0
          %415 = vmatpush1.msra.mxu0 0.0
          %416 = vmatprep.subr.mxu0 0.0
          %417 = vmatpush1.msra.mxu0 0.0
          %418 = vmatprep.subr.mxu0 0.0
          %419 = vmatpush1.msra.mxu0 0.0
          %420 = vmatprep.subr.mxu0 0.0
          %421 = vmatpush1.msra.mxu0 0.0
          %422 = vmatprep.subr.mxu0 0.0
          %423 = vmatpush1.msra.mxu0 0.0
          %424 = vmatprep.subr.mxu0 0.0
          %425 = vmatpush1.msra.mxu0 0.0
          %426 = vmatprep.subr.mxu0 0.0
          %427 = vmatpush1.msra.mxu0 0.0
          %428 = vmatprep.subr.mxu0 0.0
          %429 = vmatpush1.msra.mxu0 %v379
          %430 = vmatprep.subr.mxu0 0.0
          %431 = vmatpush1.msra.mxu0 %v378
          %432 = vmatprep.subr.mxu0 0.0
          %433 = vmatpush2.msra.mxu0 0.0
          %434 = vmatprep.subr.mxu0 0.0
          %435 = vmatpush2.msra.mxu0 0.0
          %436 = vmatprep.subr.mxu0 0.0
          %437 = vmatpush2.msra.mxu0 0.0
          %438 = vmatprep.subr.mxu0 0.0
          %439 = vmatpush2.msra.mxu0 0.0
          %440 = vmatprep.subr.mxu0 0.0
          %441 = vmatpush2.msra.mxu0 0.0
          %442 = vmatprep.subr.mxu0 0.0
          %443 = vmatpush2.msra.mxu0 0.0
          %444 = vmatprep.subr.mxu0 0.0
          %445 = vmatpush2.msra.mxu0 0.0
          %446 = vmatprep.subr.mxu0 0.0
          %447 = vmatpush2.msra.mxu0 0.0
          %448 = vmatprep.subr.mxu0 0.0
          %449 = vmatpush2.msra.mxu0 0.0
          %450 = vmatprep.subr.mxu0 0.0
          %451 = vmatpush2.msra.mxu0 0.0
          %452 = vmatprep.subr.mxu0 0.0
          %453 = vmatpush2.msra.mxu0 0.0
          %454 = vmatprep.subr.mxu0 0.0
          %455 = vmatpush2.msra.mxu0 0.0
          %456 = vmatprep.subr.mxu0 0.0
          %457 = vmatpush2.msra.mxu0 0.0
          %458 = vmatprep.subr.mxu0 0.0
          %459 = vmatpush2.msra.mxu0 0.0
          %460 = vmatprep.subr.mxu0 0.0
          %461 = vmatpush2.msra.mxu0 0.0
          %462 = vmatprep.subr.mxu0 0.0
          %463 = vmatpush2.msra.mxu0 0.0
          %464 = vmatprep.mubr.f32.mxu0 0.0
          %465 = vmatmul.mubr.f32.gmra.mxu0 %v389
          %v466 = vpop.f32.mrf.mxu0
          %v467 = vadd.f32 %v385, %v466
          %v468 = vpop.f32.mrf.mxu0
          %469 = vmatprep.mubr.f32.mxu0 0.0
          %470 = vmatmul.mubr.f32.gmra.mxu0 %v392
          %v471 = vpop.f32.mrf.mxu0
          %v472 = vadd.f32 %v385, %v471
          %v473 = vpop.f32.mrf.mxu0
          %474 = vmatprep.mubr.f32.mxu0 0.0
          %475 = vmatmul.mubr.f32.gmra.mxu0 %v395
          %v476 = vpop.f32.mrf.mxu0
          %v477 = vadd.f32 %v385, %v476
          %v478 = vpop.f32.mrf.mxu0
          %479 = vmatprep.mubr.f32.mxu0 0.0
          %480 = vmatmul.mubr.f32.gmra.mxu0 %v398
          %v481 = vpop.f32.mrf.mxu0
          %v482 = vadd.f32 %v385, %v481
          %v483 = vpop.f32.mrf.mxu0
          %484 = vdwg.mxu0
          %vm485 = vcmask 64512
          %486 = vst.msk [vmem:[#allocation2] sm:$0xff] %vm485, %v467
          %487 = vst.msk [vmem:[#allocation2 + $0x8] sm:$0xff] %vm485, %v472
          %488 = vst.msk [vmem:[#allocation2 + $0x10] sm:$0xff] %vm485, %v477
          %489 = vst.msk [vmem:[#allocation2 + $0x18] sm:$0xff] %vm485, %v482
          %494 = vrot.lane.b32.xlu0 %v467, 96
          %v495 = vpop.permute.xlu0 %494
          %496 = vrot.lane.b32.xlu0 %v472, 96
          %v497 = vpop.permute.xlu0 %496
          %498 = vrot.lane.b32.xlu0 %v477, 96
          %v499 = vpop.permute.xlu0 %498
          %500 = vrot.lane.b32.xlu0 %v482, 96
          %v501 = vpop.permute.xlu0 %500
          %506 = vst.msk [vmem:[#allocation3] sm:$0xff] %vm485, %v495
          %507 = vst.msk [vmem:[#allocation3 + $0x8] sm:$0xff] %vm485, %v497
          %508 = vst.msk [vmem:[#allocation3 + $0x10] sm:$0xff] %vm485, %v499
          %509 = vst.msk [vmem:[#allocation3 + $0x18] sm:$0xff] %vm485, %v501
          %510 = vrot.lane.b32.xlu0 %v467, 120
          %v511 = vpop.permute.xlu0 %510
          %512 = vrot.lane.b32.xlu0 %v472, 120
          %v513 = vpop.permute.xlu0 %512
          %514 = vrot.lane.b32.xlu0 %v477, 120
          %v515 = vpop.permute.xlu0 %514
          %516 = vrot.lane.b32.xlu0 %v482, 120
          %v517 = vpop.permute.xlu0 %516
          %s522 = scalar_lea.vmem [#allocation2], 32
          %523 = vst.msk [vmem:[%s522] sm:$0xff] %vm485, %v511
          %524 = vst.msk [vmem:[%s522 + $0x8] sm:$0xff] %vm485, %v513
          %525 = vst.msk [vmem:[%s522 + $0x10] sm:$0xff] %vm485, %v515
          %526 = vst.msk [vmem:[%s522 + $0x18] sm:$0xff] %vm485, %v517
          %527 = vrot.lane.b32.xlu0 %v467, 88
          %v528 = vpop.permute.xlu0 %527
          %529 = vrot.lane.b32.xlu0 %v472, 88
          %v530 = vpop.permute.xlu0 %529
          %531 = vrot.lane.b32.xlu0 %v477, 88
          %v532 = vpop.permute.xlu0 %531
          %533 = vrot.lane.b32.xlu0 %v482, 88
          %v534 = vpop.permute.xlu0 %533
          %s539 = scalar_lea.vmem [#allocation3], 32
          %540 = vst.msk [vmem:[%s539] sm:$0xff] %vm485, %v528
          %541 = vst.msk [vmem:[%s539 + $0x8] sm:$0xff] %vm485, %v530
          %542 = vst.msk [vmem:[%s539 + $0x10] sm:$0xff] %vm485, %v532
          %543 = vst.msk [vmem:[%s539 + $0x18] sm:$0xff] %vm485, %v534
          %544 = vrot.lane.b32.xlu0 %v467, 112
          %v545 = vpop.permute.xlu0 %544
          %546 = vrot.lane.b32.xlu0 %v472, 112
          %v547 = vpop.permute.xlu0 %546
          %548 = vrot.lane.b32.xlu0 %v477, 112
          %v549 = vpop.permute.xlu0 %548
          %550 = vrot.lane.b32.xlu0 %v482, 112
          %v551 = vpop.permute.xlu0 %550
          %s556 = scalar_lea.vmem [#allocation2], 64
          %557 = vst.msk [vmem:[%s556] sm:$0xff] %vm485, %v545
          %558 = vst.msk [vmem:[%s556 + $0x8] sm:$0xff] %vm485, %v547
          %559 = vst.msk [vmem:[%s556 + $0x10] sm:$0xff] %vm485, %v549
          %560 = vst.msk [vmem:[%s556 + $0x18] sm:$0xff] %vm485, %v551
          %561 = vrot.lane.b32.xlu0 %v467, 80
          %v562 = vpop.permute.xlu0 %561
          %563 = vrot.lane.b32.xlu0 %v472, 80
          %v564 = vpop.permute.xlu0 %563
          %565 = vrot.lane.b32.xlu0 %v477, 80
          %v566 = vpop.permute.xlu0 %565
          %567 = vrot.lane.b32.xlu0 %v482, 80
          %v568 = vpop.permute.xlu0 %567
          %s573 = scalar_lea.vmem [#allocation3], 64
          %574 = vst.msk [vmem:[%s573] sm:$0xff] %vm485, %v562
          %575 = vst.msk [vmem:[%s573 + $0x8] sm:$0xff] %vm485, %v564
          %576 = vst.msk [vmem:[%s573 + $0x10] sm:$0xff] %vm485, %v566
          %577 = vst.msk [vmem:[%s573 + $0x18] sm:$0xff] %vm485, %v568
          %578 = vrot.lane.b32.xlu0 %v467, 104
          %v579 = vpop.permute.xlu0 %578
          %580 = vrot.lane.b32.xlu0 %v472, 104
          %v581 = vpop.permute.xlu0 %580
          %582 = vrot.lane.b32.xlu0 %v477, 104
          %v583 = vpop.permute.xlu0 %582
          %584 = vrot.lane.b32.xlu0 %v482, 104
          %v585 = vpop.permute.xlu0 %584
          %s590 = scalar_lea.vmem [#allocation2], 96
          %591 = vst.msk [vmem:[%s590] sm:$0xff] %vm485, %v579
          %592 = vst.msk [vmem:[%s590 + $0x8] sm:$0xff] %vm485, %v581
          %593 = vst.msk [vmem:[%s590 + $0x10] sm:$0xff] %vm485, %v583
          %594 = vst.msk [vmem:[%s590 + $0x18] sm:$0xff] %vm485, %v585
          %595 = vrot.lane.b32.xlu0 %v467, 72
          %v596 = vpop.permute.xlu0 %595
          %597 = vrot.lane.b32.xlu0 %v472, 72
          %v598 = vpop.permute.xlu0 %597
          %599 = vrot.lane.b32.xlu0 %v477, 72
          %v600 = vpop.permute.xlu0 %599
          %601 = vrot.lane.b32.xlu0 %v482, 72
          %v602 = vpop.permute.xlu0 %601
          %s607 = scalar_lea.vmem [#allocation3], 96
          %608 = vst.msk [vmem:[%s607] sm:$0xff] %vm485, %v596
          %609 = vst.msk [vmem:[%s607 + $0x8] sm:$0xff] %vm485, %v598
          %610 = vst.msk [vmem:[%s607 + $0x10] sm:$0xff] %vm485, %v600
          %611 = vst.msk [vmem:[%s607 + $0x18] sm:$0xff] %vm485, %v602
        $region60: #{tpu_custom_call.1} parent=51 // pred_fallthru
          _
        %v612 = vld [vmem:[%s362] sm:$0xff]
        %v613 = vld [vmem:[%s362 + $0x8] sm:$0xff]
        %v614 = vld [vmem:[%s2] sm:$0xff]
        %v615 = vld [vmem:[%s2 + $0x8] sm:$0xff]
        %v616 = vld [vmem:[%s2 + $0x10] sm:$0xff]
        %v617 = vld [vmem:[%s2 + $0x18] sm:$0xff]
        %v618 = vld [vmem:[%s3] sm:$0x1]
        %v620 = vlaneseq
        %v621 = vshrl.u32 %v620, 7
        %v622 = vsub.s32 0, %v621
        %v623 = vrot.slane %v618, %v622
        %vm625 = vcmask 261120
        %v627 = vsel %vm625, %v612, 0
        %v630 = vsel %vm625, %v613, 0
        %632 = vmatprep.subr.mxu0 0.0
        %633 = vmatpush1.msra.mxu0 0.0
        %634 = vmatprep.subr.mxu0 0.0
        %635 = vmatpush1.msra.mxu0 0.0
        %636 = vmatprep.subr.mxu0 0.0
        %637 = vmatpush1.msra.mxu0 0.0
        %638 = vmatprep.subr.mxu0 0.0
        %639 = vmatpush1.msra.mxu0 0.0
        %640 = vmatprep.subr.mxu0 0.0
        %641 = vmatpush1.msra.mxu0 0.0
        %642 = vmatprep.subr.mxu0 0.0
        %643 = vmatpush1.msra.mxu0 0.0
        %644 = vmatprep.subr.mxu0 0.0
        %645 = vmatpush1.msra.mxu0 0.0
        %646 = vmatprep.subr.mxu0 0.0
        %647 = vmatpush1.msra.mxu0 0.0
        %648 = vmatprep.subr.mxu0 0.0
        %649 = vmatpush1.msra.mxu0 0.0
        %650 = vmatprep.subr.mxu0 0.0
        %651 = vmatpush1.msra.mxu0 0.0
        %652 = vmatprep.subr.mxu0 0.0
        %653 = vmatpush1.msra.mxu0 0.0
        %654 = vmatprep.subr.mxu0 0.0
        %655 = vmatpush1.msra.mxu0 0.0
        %656 = vmatprep.subr.mxu0 0.0
        %657 = vmatpush1.msra.mxu0 %v617
        %658 = vmatprep.subr.mxu0 0.0
        %659 = vmatpush1.msra.mxu0 %v616
        %660 = vmatprep.subr.mxu0 0.0
        %661 = vmatpush1.msra.mxu0 %v615
        %662 = vmatprep.subr.mxu0 0.0
        %663 = vmatpush1.msra.mxu0 %v614
        %664 = vmatprep.subr.mxu0 0.0
        %665 = vmatpush2.msra.mxu0 0.0
        %666 = vmatprep.subr.mxu0 0.0
        %667 = vmatpush2.msra.mxu0 0.0
        %668 = vmatprep.subr.mxu0 0.0
        %669 = vmatpush2.msra.mxu0 0.0
        %670 = vmatprep.subr.mxu0 0.0
        %671 = vmatpush2.msra.mxu0 0.0
        %672 = vmatprep.subr.mxu0 0.0
        %673 = vmatpush2.msra.mxu0 0.0
        %674 = vmatprep.subr.mxu0 0.0
        %675 = vmatpush2.msra.mxu0 0.0
        %676 = vmatprep.subr.mxu0 0.0
        %677 = vmatpush2.msra.mxu0 0.0
        %678 = vmatprep.subr.mxu0 0.0
        %679 = vmatpush2.msra.mxu0 0.0
        %680 = vmatprep.subr.mxu0 0.0
        %681 = vmatpush2.msra.mxu0 0.0
        %682 = vmatprep.subr.mxu0 0.0
        %683 = vmatpush2.msra.mxu0 0.0
        %684 = vmatprep.subr.mxu0 0.0
        %685 = vmatpush2.msra.mxu0 0.0
        %686 = vmatprep.subr.mxu0 0.0
        %687 = vmatpush2.msra.mxu0 0.0
        %688 = vmatprep.subr.mxu0 0.0
        %689 = vmatpush2.msra.mxu0 0.0
        %690 = vmatprep.subr.mxu0 0.0
        %691 = vmatpush2.msra.mxu0 0.0
        %692 = vmatprep.subr.mxu0 0.0
        %693 = vmatpush2.msra.mxu0 0.0
        %694 = vmatprep.subr.mxu0 0.0
        %695 = vmatpush2.msra.mxu0 0.0
        %696 = vmatprep.mubr.f32.mxu0 0.0
        %697 = vmatmul.mubr.f32.gmra.mxu0 %v627
        %v698 = vpop.f32.mrf.mxu0
        %v699 = vadd.f32 %v623, %v698
        %v700 = vpop.f32.mrf.mxu0
        %701 = vmatprep.mubr.f32.mxu0 0.0
        %702 = vmatmul.mubr.f32.gmra.mxu0 %v630
        %v703 = vpop.f32.mrf.mxu0
        %v704 = vadd.f32 %v623, %v703
        %v705 = vpop.f32.mrf.mxu0
        %706 = vdwg.mxu0
        %v707 = vld [vmem:[#allocation2] sm:$0xff]
        %v708 = vld [vmem:[#allocation2 + $0x8] sm:$0xff]
        %v709 = vld [vmem:[#allocation2 + $0x10] sm:$0xff]
        %v710 = vld [vmem:[#allocation2 + $0x18] sm:$0xff]
        %vm711 = vcmask 64512
        %v713 = vsel %vm711, %v699, 0
        %v716 = vsel %vm711, %v704, 0
        %v719 = vsel %vm711, %v707, 0
        %v722 = vsel %vm711, %v708, 0
        %v725 = vsel %vm711, %v709, 0
        %v728 = vsel %vm711, %v710, 0
        %730 = vmatprep.subr.mxu0 0.0
        %731 = vmatpush1.xpose.msra.mxu0 0.0
        %732 = vmatprep.subr.mxu0 0.0
        %733 = vmatpush1.xpose.msra.mxu0 0.0
        %734 = vmatprep.subr.mxu0 0.0
        %735 = vmatpush1.xpose.msra.mxu0 0.0
        %736 = vmatprep.subr.mxu0 0.0
        %737 = vmatpush1.xpose.msra.mxu0 0.0
        %738 = vmatprep.subr.mxu0 0.0
        %739 = vmatpush1.xpose.msra.mxu0 0.0
        %740 = vmatprep.subr.mxu0 0.0
        %741 = vmatpush1.xpose.msra.mxu0 0.0
        %742 = vmatprep.subr.mxu0 0.0
        %743 = vmatpush1.xpose.msra.mxu0 0.0
        %744 = vmatprep.subr.mxu0 0.0
        %745 = vmatpush1.xpose.msra.mxu0 0.0
        %746 = vmatprep.subr.mxu0 0.0
        %747 = vmatpush1.xpose.msra.mxu0 0.0
        %748 = vmatprep.subr.mxu0 0.0
        %749 = vmatpush1.xpose.msra.mxu0 0.0
        %750 = vmatprep.subr.mxu0 0.0
        %751 = vmatpush1.xpose.msra.mxu0 0.0
        %752 = vmatprep.subr.mxu0 0.0
        %753 = vmatpush1.xpose.msra.mxu0 0.0
        %754 = vmatprep.subr.mxu0 0.0
        %755 = vmatpush1.xpose.msra.mxu0 %v728
        %756 = vmatprep.subr.mxu0 0.0
        %757 = vmatpush1.xpose.msra.mxu0 %v725
        %758 = vmatprep.subr.mxu0 0.0
        %759 = vmatpush1.xpose.msra.mxu0 %v722
        %760 = vmatprep.subr.mxu0 0.0
        %761 = vmatpush1.xpose.msra.mxu0 %v719
        %762 = vmatprep.subr.mxu0 0.0
        %763 = vmatpush2.xpose.msra.mxu0 0.0
        %764 = vmatprep.subr.mxu0 0.0
        %765 = vmatpush2.xpose.msra.mxu0 0.0
        %766 = vmatprep.subr.mxu0 0.0
        %767 = vmatpush2.xpose.msra.mxu0 0.0
        %768 = vmatprep.subr.mxu0 0.0
        %769 = vmatpush2.xpose.msra.mxu0 0.0
        %770 = vmatprep.subr.mxu0 0.0
        %771 = vmatpush2.xpose.msra.mxu0 0.0
        %772 = vmatprep.subr.mxu0 0.0
        %773 = vmatpush2.xpose.msra.mxu0 0.0
        %774 = vmatprep.subr.mxu0 0.0
        %775 = vmatpush2.xpose.msra.mxu0 0.0
        %776 = vmatprep.subr.mxu0 0.0
        %777 = vmatpush2.xpose.msra.mxu0 0.0
        %778 = vmatprep.subr.mxu0 0.0
        %779 = vmatpush2.xpose.msra.mxu0 0.0
        %780 = vmatprep.subr.mxu0 0.0
        %781 = vmatpush2.xpose.msra.mxu0 0.0
        %782 = vmatprep.subr.mxu0 0.0
        %783 = vmatpush2.xpose.msra.mxu0 0.0
        %784 = vmatprep.subr.mxu0 0.0
        %785 = vmatpush2.xpose.msra.mxu0 0.0
        %786 = vmatprep.subr.mxu0 0.0
        %787 = vmatpush2.xpose.msra.mxu0 0.0
        %788 = vmatprep.subr.mxu0 0.0
        %789 = vmatpush2.xpose.msra.mxu0 0.0
        %790 = vmatprep.subr.mxu0 0.0
        %791 = vmatpush2.xpose.msra.mxu0 0.0
        %792 = vmatprep.subr.mxu0 0.0
        %793 = vmatpush2.xpose.msra.mxu0 0.0
        %794 = vmatprep.mubr.f32.mxu0 0.0
        %795 = vmatmul.mubr.f32.gmra.mxu0 %v713
        %v796 = vpop.f32.mrf.mxu0
        %v797 = vadd.f32 0.0, %v796
        %v798 = vpop.f32.mrf.mxu0
        %799 = vmatprep.mubr.f32.mxu0 0.0
        %800 = vmatmul.mubr.f32.gmra.mxu0 %v716
        %v801 = vpop.f32.mrf.mxu0
        %v802 = vadd.f32 0.0, %v801
        %v803 = vpop.f32.mrf.mxu0
        %804 = vdwg.mxu0
        %v805 = vsel %vm625, %v797, -inf
        %806 = vmax.xlane.f32.xlu0 %v805
        %v807 = vpop.xlane.xlu0 %806
        %v808 = vsel %vm625, %v802, -inf
        %809 = vmax.xlane.f32.xlu0 %v808
        %v810 = vpop.xlane.xlu0 %809
        %v811 = vsub.f32 %v797, %v807
        %v812 = vsub.f32 %v802, %v810
        %v813 = vmul.f32 %v811, 1.442695
        %v814 = vpow.pop %v813
        %v815 = vmul.f32 %v812, 1.442695
        %v816 = vpow.pop %v815
        %v817 = vsel %vm625, %v814, 0.0
        %818 = vadd.xlane.f32.xlu0 %v817
        %v819 = vpop.xlane.xlu0 %818
        %v820 = vsel %vm625, %v816, 0.0
        %821 = vadd.xlane.f32.xlu0 %v820
        %v822 = vpop.xlane.xlu0 %821
        %v823 = vld [vmem:[#allocation3] sm:$0xff]
        %v824 = vld [vmem:[#allocation3 + $0x8] sm:$0xff]
        %v825 = vld [vmem:[#allocation3 + $0x10] sm:$0xff]
        %v826 = vld [vmem:[#allocation3 + $0x18] sm:$0xff]
        %v828 = vsel %vm625, %v814, 0
        %v831 = vsel %vm625, %v816, 0
        %833 = vmatprep.subr.mxu0 0.0
        %834 = vmatpush1.msra.mxu0 0.0
        %835 = vmatprep.subr.mxu0 0.0
        %836 = vmatpush1.msra.mxu0 0.0
        %837 = vmatprep.subr.mxu0 0.0
        %838 = vmatpush1.msra.mxu0 0.0
        %839 = vmatprep.subr.mxu0 0.0
        %840 = vmatpush1.msra.mxu0 0.0
        %841 = vmatprep.subr.mxu0 0.0
        %842 = vmatpush1.msra.mxu0 0.0
        %843 = vmatprep.subr.mxu0 0.0
        %844 = vmatpush1.msra.mxu0 0.0
        %845 = vmatprep.subr.mxu0 0.0
        %846 = vmatpush1.msra.mxu0 0.0
        %847 = vmatprep.subr.mxu0 0.0
        %848 = vmatpush1.msra.mxu0 0.0
        %849 = vmatprep.subr.mxu0 0.0
        %850 = vmatpush1.msra.mxu0 0.0
        %851 = vmatprep.subr.mxu0 0.0
        %852 = vmatpush1.msra.mxu0 0.0
        %853 = vmatprep.subr.mxu0 0.0
        %854 = vmatpush1.msra.mxu0 0.0
        %855 = vmatprep.subr.mxu0 0.0
        %856 = vmatpush1.msra.mxu0 0.0
        %857 = vmatprep.subr.mxu0 0.0
        %858 = vmatpush1.msra.mxu0 %v826
        %859 = vmatprep.subr.mxu0 0.0
        %860 = vmatpush1.msra.mxu0 %v825
        %861 = vmatprep.subr.mxu0 0.0
        %862 = vmatpush1.msra.mxu0 %v824
        %863 = vmatprep.subr.mxu0 0.0
        %864 = vmatpush1.msra.mxu0 %v823
        %865 = vmatprep.subr.mxu0 0.0
        %866 = vmatpush2.msra.mxu0 0.0
        %867 = vmatprep.subr.mxu0 0.0
        %868 = vmatpush2.msra.mxu0 0.0
        %869 = vmatprep.subr.mxu0 0.0
        %870 = vmatpush2.msra.mxu0 0.0
        %871 = vmatprep.subr.mxu0 0.0
        %872 = vmatpush2.msra.mxu0 0.0
        %873 = vmatprep.subr.mxu0 0.0
        %874 = vmatpush2.msra.mxu0 0.0
        %875 = vmatprep.subr.mxu0 0.0
        %876 = vmatpush2.msra.mxu0 0.0
        %877 = vmatprep.subr.mxu0 0.0
        %878 = vmatpush2.msra.mxu0 0.0
        %879 = vmatprep.subr.mxu0 0.0
        %880 = vmatpush2.msra.mxu0 0.0
        %881 = vmatprep.subr.mxu0 0.0
        %882 = vmatpush2.msra.mxu0 0.0
        %883 = vmatprep.subr.mxu0 0.0
        %884 = vmatpush2.msra.mxu0 0.0
        %885 = vmatprep.subr.mxu0 0.0
        %886 = vmatpush2.msra.mxu0 0.0
        %887 = vmatprep.subr.mxu0 0.0
        %888 = vmatpush2.msra.mxu0 0.0
        %889 = vmatprep.subr.mxu0 0.0
        %890 = vmatpush2.msra.mxu0 0.0
        %891 = vmatprep.subr.mxu0 0.0
        %892 = vmatpush2.msra.mxu0 0.0
        %893 = vmatprep.subr.mxu0 0.0
        %894 = vmatpush2.msra.mxu0 0.0
        %895 = vmatprep.subr.mxu0 0.0
        %896 = vmatpush2.msra.mxu0 0.0
        %897 = vmatprep.mubr.f32.mxu0 0.0
        %898 = vmatmul.mubr.f32.gmra.mxu0 %v828
        %v899 = vpop.f32.mrf.mxu0
        %v900 = vadd.f32 0.0, %v899
        %v901 = vpop.f32.mrf.mxu0
        %902 = vmatprep.mubr.f32.mxu0 0.0
        %903 = vmatmul.mubr.f32.gmra.mxu0 %v831
        %v904 = vpop.f32.mrf.mxu0
        %v905 = vadd.f32 0.0, %v904
        %v906 = vpop.f32.mrf.mxu0
        %907 = vdwg.mxu0
        %v908 = vrcp.pop %v819
        %v909 = vrcp.pop %v822
        %v910 = vmul.f32 %v900, %v908
        %v911 = vmul.f32 %v905, %v909
        %912 = vst.msk [vmem:[#allocation4] sm:$0xff] %vm711, %v910
        %913 = vst.msk [vmem:[#allocation4 + $0x8] sm:$0xff] %vm711, %v911
        %s914 = scalar_lea.vmem [#allocation2], 32
        %v915 = vld [vmem:[%s914] sm:$0xff]
        %v916 = vld [vmem:[%s914 + $0x8] sm:$0xff]
        %v917 = vld [vmem:[%s914 + $0x10] sm:$0xff]
        %v918 = vld [vmem:[%s914 + $0x18] sm:$0xff]
        %919 = vrot.lane.b32.xlu0 %v699, 120
        %v920 = vpop.permute.xlu0 %919
        %921 = vrot.lane.b32.xlu0 %v704, 120
        %v922 = vpop.permute.xlu0 %921
        %v923 = vsel %vm711, %v920, 0
        %v925 = vsel %vm711, %v922, 0
        %v928 = vsel %vm711, %v915, 0
        %v931 = vsel %vm711, %v916, 0
        %v934 = vsel %vm711, %v917, 0
        %v937 = vsel %vm711, %v918, 0
        %939 = vmatprep.subr.mxu0 0.0
        %940 = vmatpush1.xpose.msra.mxu0 0.0
        %941 = vmatprep.subr.mxu0 0.0
        %942 = vmatpush1.xpose.msra.mxu0 0.0
        %943 = vmatprep.subr.mxu0 0.0
        %944 = vmatpush1.xpose.msra.mxu0 0.0
        %945 = vmatprep.subr.mxu0 0.0
        %946 = vmatpush1.xpose.msra.mxu0 0.0
        %947 = vmatprep.subr.mxu0 0.0
        %948 = vmatpush1.xpose.msra.mxu0 0.0
        %949 = vmatprep.subr.mxu0 0.0
        %950 = vmatpush1.xpose.msra.mxu0 0.0
        %951 = vmatprep.subr.mxu0 0.0
        %952 = vmatpush1.xpose.msra.mxu0 0.0
        %953 = vmatprep.subr.mxu0 0.0
        %954 = vmatpush1.xpose.msra.mxu0 0.0
        %955 = vmatprep.subr.mxu0 0.0
        %956 = vmatpush1.xpose.msra.mxu0 0.0
        %957 = vmatprep.subr.mxu0 0.0
        %958 = vmatpush1.xpose.msra.mxu0 0.0
        %959 = vmatprep.subr.mxu0 0.0
        %960 = vmatpush1.xpose.msra.mxu0 0.0
        %961 = vmatprep.subr.mxu0 0.0
        %962 = vmatpush1.xpose.msra.mxu0 0.0
        %963 = vmatprep.subr.mxu0 0.0
        %964 = vmatpush1.xpose.msra.mxu0 %v937
        %965 = vmatprep.subr.mxu0 0.0
        %966 = vmatpush1.xpose.msra.mxu0 %v934
        %967 = vmatprep.subr.mxu0 0.0
        %968 = vmatpush1.xpose.msra.mxu0 %v931
        %969 = vmatprep.subr.mxu0 0.0
        %970 = vmatpush1.xpose.msra.mxu0 %v928
        %971 = vmatprep.subr.mxu0 0.0
        %972 = vmatpush2.xpose.msra.mxu0 0.0
        %973 = vmatprep.subr.mxu0 0.0
        %974 = vmatpush2.xpose.msra.mxu0 0.0
        %975 = vmatprep.subr.mxu0 0.0
        %976 = vmatpush2.xpose.msra.mxu0 0.0
        %977 = vmatprep.subr.mxu0 0.0
        %978 = vmatpush2.xpose.msra.mxu0 0.0
        %979 = vmatprep.subr.mxu0 0.0
        %980 = vmatpush2.xpose.msra.mxu0 0.0
        %981 = vmatprep.subr.mxu0 0.0
        %982 = vmatpush2.xpose.msra.mxu0 0.0
        %983 = vmatprep.subr.mxu0 0.0
        %984 = vmatpush2.xpose.msra.mxu0 0.0
        %985 = vmatprep.subr.mxu0 0.0
        %986 = vmatpush2.xpose.msra.mxu0 0.0
        %987 = vmatprep.subr.mxu0 0.0
        %988 = vmatpush2.xpose.msra.mxu0 0.0
        %989 = vmatprep.subr.mxu0 0.0
        %990 = vmatpush2.xpose.msra.mxu0 0.0
        %991 = vmatprep.subr.mxu0 0.0
        %992 = vmatpush2.xpose.msra.mxu0 0.0
        %993 = vmatprep.subr.mxu0 0.0
        %994 = vmatpush2.xpose.msra.mxu0 0.0
        %995 = vmatprep.subr.mxu0 0.0
        %996 = vmatpush2.xpose.msra.mxu0 0.0
        %997 = vmatprep.subr.mxu0 0.0
        %998 = vmatpush2.xpose.msra.mxu0 0.0
        %999 = vmatprep.subr.mxu0 0.0
        %1000 = vmatpush2.xpose.msra.mxu0 0.0
        %1001 = vmatprep.subr.mxu0 0.0
        %1002 = vmatpush2.xpose.msra.mxu0 0.0
        %1003 = vmatprep.mubr.f32.mxu0 0.0
        %1004 = vmatmul.mubr.f32.gmra.mxu0 %v923
        %v1005 = vpop.f32.mrf.mxu0
        %v1006 = vadd.f32 0.0, %v1005
        %v1007 = vpop.f32.mrf.mxu0
        %1008 = vmatprep.mubr.f32.mxu0 0.0
        %1009 = vmatmul.mubr.f32.gmra.mxu0 %v925
        %v1010 = vpop.f32.mrf.mxu0
        %v1011 = vadd.f32 0.0, %v1010
        %v1012 = vpop.f32.mrf.mxu0
        %1013 = vdwg.mxu0
        %v1014 = vsel %vm625, %v1006, -inf
        %1015 = vmax.xlane.f32.xlu0 %v1014
        %v1016 = vpop.xlane.xlu0 %1015
        %v1017 = vsel %vm625, %v1011, -inf
        %1018 = vmax.xlane.f32.xlu0 %v1017
        %v1019 = vpop.xlane.xlu0 %1018
        %v1020 = vsub.f32 %v1006, %v1016
        %v1021 = vsub.f32 %v1011, %v1019
        %v1022 = vmul.f32 %v1020, 1.442695
        %v1023 = vpow.pop %v1022
        %v1024 = vmul.f32 %v1021, 1.442695
        %v1025 = vpow.pop %v1024
        %v1026 = vsel %vm625, %v1023, 0.0
        %1027 = vadd.xlane.f32.xlu0 %v1026
        %v1028 = vpop.xlane.xlu0 %1027
        %v1029 = vsel %vm625, %v1025, 0.0
        %1030 = vadd.xlane.f32.xlu0 %v1029
        %v1031 = vpop.xlane.xlu0 %1030
        %s1032 = scalar_lea.vmem [#allocation3], 32
        %v1033 = vld [vmem:[%s1032] sm:$0xff]
        %v1034 = vld [vmem:[%s1032 + $0x8] sm:$0xff]
        %v1035 = vld [vmem:[%s1032 + $0x10] sm:$0xff]
        %v1036 = vld [vmem:[%s1032 + $0x18] sm:$0xff]
        %v1038 = vsel %vm625, %v1023, 0
        %v1041 = vsel %vm625, %v1025, 0
        %1043 = vmatprep.subr.mxu0 0.0
        %1044 = vmatpush1.msra.mxu0 0.0
        %1045 = vmatprep.subr.mxu0 0.0
        %1046 = vmatpush1.msra.mxu0 0.0
        %1047 = vmatprep.subr.mxu0 0.0
        %1048 = vmatpush1.msra.mxu0 0.0
        %1049 = vmatprep.subr.mxu0 0.0
        %1050 = vmatpush1.msra.mxu0 0.0
        %1051 = vmatprep.subr.mxu0 0.0
        %1052 = vmatpush1.msra.mxu0 0.0
        %1053 = vmatprep.subr.mxu0 0.0
        %1054 = vmatpush1.msra.mxu0 0.0
        %1055 = vmatprep.subr.mxu0 0.0
        %1056 = vmatpush1.msra.mxu0 0.0
        %1057 = vmatprep.subr.mxu0 0.0
        %1058 = vmatpush1.msra.mxu0 0.0
        %1059 = vmatprep.subr.mxu0 0.0
        %1060 = vmatpush1.msra.mxu0 0.0
        %1061 = vmatprep.subr.mxu0 0.0
        %1062 = vmatpush1.msra.mxu0 0.0
        %1063 = vmatprep.subr.mxu0 0.0
        %1064 = vmatpush1.msra.mxu0 0.0
        %1065 = vmatprep.subr.mxu0 0.0
        %1066 = vmatpush1.msra.mxu0 0.0
        %1067 = vmatprep.subr.mxu0 0.0
        %1068 = vmatpush1.msra.mxu0 %v1036
        %1069 = vmatprep.subr.mxu0 0.0
        %1070 = vmatpush1.msra.mxu0 %v1035
        %1071 = vmatprep.subr.mxu0 0.0
        %1072 = vmatpush1.msra.mxu0 %v1034
        %1073 = vmatprep.subr.mxu0 0.0
        %1074 = vmatpush1.msra.mxu0 %v1033
        %1075 = vmatprep.subr.mxu0 0.0
        %1076 = vmatpush2.msra.mxu0 0.0
        %1077 = vmatprep.subr.mxu0 0.0
        %1078 = vmatpush2.msra.mxu0 0.0
        %1079 = vmatprep.subr.mxu0 0.0
        %1080 = vmatpush2.msra.mxu0 0.0
        %1081 = vmatprep.subr.mxu0 0.0
        %1082 = vmatpush2.msra.mxu0 0.0
        %1083 = vmatprep.subr.mxu0 0.0
        %1084 = vmatpush2.msra.mxu0 0.0
        %1085 = vmatprep.subr.mxu0 0.0
        %1086 = vmatpush2.msra.mxu0 0.0
        %1087 = vmatprep.subr.mxu0 0.0
        %1088 = vmatpush2.msra.mxu0 0.0
        %1089 = vmatprep.subr.mxu0 0.0
        %1090 = vmatpush2.msra.mxu0 0.0
        %1091 = vmatprep.subr.mxu0 0.0
        %1092 = vmatpush2.msra.mxu0 0.0
        %1093 = vmatprep.subr.mxu0 0.0
        %1094 = vmatpush2.msra.mxu0 0.0
        %1095 = vmatprep.subr.mxu0 0.0
        %1096 = vmatpush2.msra.mxu0 0.0
        %1097 = vmatprep.subr.mxu0 0.0
        %1098 = vmatpush2.msra.mxu0 0.0
        %1099 = vmatprep.subr.mxu0 0.0
        %1100 = vmatpush2.msra.mxu0 0.0
        %1101 = vmatprep.subr.mxu0 0.0
        %1102 = vmatpush2.msra.mxu0 0.0
        %1103 = vmatprep.subr.mxu0 0.0
        %1104 = vmatpush2.msra.mxu0 0.0
        %1105 = vmatprep.subr.mxu0 0.0
        %1106 = vmatpush2.msra.mxu0 0.0
        %1107 = vmatprep.mubr.f32.mxu0 0.0
        %1108 = vmatmul.mubr.f32.gmra.mxu0 %v1038
        %v1109 = vpop.f32.mrf.mxu0
        %v1110 = vadd.f32 0.0, %v1109
        %v1111 = vpop.f32.mrf.mxu0
        %1112 = vmatprep.mubr.f32.mxu0 0.0
        %1113 = vmatmul.mubr.f32.gmra.mxu0 %v1041
        %v1114 = vpop.f32.mrf.mxu0
        %v1115 = vadd.f32 0.0, %v1114
        %v1116 = vpop.f32.mrf.mxu0
        %1117 = vdwg.mxu0
        %v1118 = vrcp.pop %v1028
        %v1119 = vrcp.pop %v1031
        %v1120 = vmul.f32 %v1110, %v1118
        %v1121 = vmul.f32 %v1115, %v1119
        %1124 = vrot.lane.b32.xlu0 %v1120, 8
        %v1125 = vpop.permute.xlu0 %1124
        %1126 = vrot.lane.b32.xlu0 %v1121, 8
        %v1127 = vpop.permute.xlu0 %1126
        %vm1130 = vcmask 130112
        %1131 = vst.msk [vmem:[#allocation4] sm:$0xff] %vm1130, %v1125
        %1132 = vst.msk [vmem:[#allocation4 + $0x8] sm:$0xff] %vm1130, %v1127
        %s1133 = scalar_lea.vmem [#allocation2], 64
        %v1134 = vld [vmem:[%s1133] sm:$0xff]
        %v1135 = vld [vmem:[%s1133 + $0x8] sm:$0xff]
        %v1136 = vld [vmem:[%s1133 + $0x10] sm:$0xff]
        %v1137 = vld [vmem:[%s1133 + $0x18] sm:$0xff]
        %1138 = vrot.lane.b32.xlu0 %v699, 112
        %v1139 = vpop.permute.xlu0 %1138
        %1140 = vrot.lane.b32.xlu0 %v704, 112
        %v1141 = vpop.permute.xlu0 %1140
        %v1142 = vsel %vm711, %v1139, 0
        %v1144 = vsel %vm711, %v1141, 0
        %v1147 = vsel %vm711, %v1134, 0
        %v1150 = vsel %vm711, %v1135, 0
        %v1153 = vsel %vm711, %v1136, 0
        %v1156 = vsel %vm711, %v1137, 0
        %1158 = vmatprep.subr.mxu0 0.0
        %1159 = vmatpush1.xpose.msra.mxu0 0.0
        %1160 = vmatprep.subr.mxu0 0.0
        %1161 = vmatpush1.xpose.msra.mxu0 0.0
        %1162 = vmatprep.subr.mxu0 0.0
        %1163 = vmatpush1.xpose.msra.mxu0 0.0
        %1164 = vmatprep.subr.mxu0 0.0
        %1165 = vmatpush1.xpose.msra.mxu0 0.0
        %1166 = vmatprep.subr.mxu0 0.0
        %1167 = vmatpush1.xpose.msra.mxu0 0.0
        %1168 = vmatprep.subr.mxu0 0.0
        %1169 = vmatpush1.xpose.msra.mxu0 0.0
        %1170 = vmatprep.subr.mxu0 0.0
        %1171 = vmatpush1.xpose.msra.mxu0 0.0
        %1172 = vmatprep.subr.mxu0 0.0
        %1173 = vmatpush1.xpose.msra.mxu0 0.0
        %1174 = vmatprep.subr.mxu0 0.0
        %1175 = vmatpush1.xpose.msra.mxu0 0.0
        %1176 = vmatprep.subr.mxu0 0.0
        %1177 = vmatpush1.xpose.msra.mxu0 0.0
        %1178 = vmatprep.subr.mxu0 0.0
        %1179 = vmatpush1.xpose.msra.mxu0 0.0
        %1180 = vmatprep.subr.mxu0 0.0
        %1181 = vmatpush1.xpose.msra.mxu0 0.0
        %1182 = vmatprep.subr.mxu0 0.0
        %1183 = vmatpush1.xpose.msra.mxu0 %v1156
        %1184 = vmatprep.subr.mxu0 0.0
        %1185 = vmatpush1.xpose.msra.mxu0 %v1153
        %1186 = vmatprep.subr.mxu0 0.0
        %1187 = vmatpush1.xpose.msra.mxu0 %v1150
        %1188 = vmatprep.subr.mxu0 0.0
        %1189 = vmatpush1.xpose.msra.mxu0 %v1147
        %1190 = vmatprep.subr.mxu0 0.0
        %1191 = vmatpush2.xpose.msra.mxu0 0.0
        %1192 = vmatprep.subr.mxu0 0.0
        %1193 = vmatpush2.xpose.msra.mxu0 0.0
        %1194 = vmatprep.subr.mxu0 0.0
        %1195 = vmatpush2.xpose.msra.mxu0 0.0
        %1196 = vmatprep.subr.mxu0 0.0
        %1197 = vmatpush2.xpose.msra.mxu0 0.0
        %1198 = vmatprep.subr.mxu0 0.0
        %1199 = vmatpush2.xpose.msra.mxu0 0.0
        %1200 = vmatprep.subr.mxu0 0.0
        %1201 = vmatpush2.xpose.msra.mxu0 0.0
        %1202 = vmatprep.subr.mxu0 0.0
        %1203 = vmatpush2.xpose.msra.mxu0 0.0
        %1204 = vmatprep.subr.mxu0 0.0
        %1205 = vmatpush2.xpose.msra.mxu0 0.0
        %1206 = vmatprep.subr.mxu0 0.0
        %1207 = vmatpush2.xpose.msra.mxu0 0.0
        %1208 = vmatprep.subr.mxu0 0.0
        %1209 = vmatpush2.xpose.msra.mxu0 0.0
        %1210 = vmatprep.subr.mxu0 0.0
        %1211 = vmatpush2.xpose.msra.mxu0 0.0
        %1212 = vmatprep.subr.mxu0 0.0
        %1213 = vmatpush2.xpose.msra.mxu0 0.0
        %1214 = vmatprep.subr.mxu0 0.0
        %1215 = vmatpush2.xpose.msra.mxu0 0.0
        %1216 = vmatprep.subr.mxu0 0.0
        %1217 = vmatpush2.xpose.msra.mxu0 0.0
        %1218 = vmatprep.subr.mxu0 0.0
        %1219 = vmatpush2.xpose.msra.mxu0 0.0
        %1220 = vmatprep.subr.mxu0 0.0
        %1221 = vmatpush2.xpose.msra.mxu0 0.0
        %1222 = vmatprep.mubr.f32.mxu0 0.0
        %1223 = vmatmul.mubr.f32.gmra.mxu0 %v1142
        %v1224 = vpop.f32.mrf.mxu0
        %v1225 = vadd.f32 0.0, %v1224
        %v1226 = vpop.f32.mrf.mxu0
        %1227 = vmatprep.mubr.f32.mxu0 0.0
        %1228 = vmatmul.mubr.f32.gmra.mxu0 %v1144
        %v1229 = vpop.f32.mrf.mxu0
        %v1230 = vadd.f32 0.0, %v1229
        %v1231 = vpop.f32.mrf.mxu0
        %1232 = vdwg.mxu0
        %v1233 = vsel %vm625, %v1225, -inf
        %1234 = vmax.xlane.f32.xlu0 %v1233
        %v1235 = vpop.xlane.xlu0 %1234
        %v1236 = vsel %vm625, %v1230, -inf
        %1237 = vmax.xlane.f32.xlu0 %v1236
        %v1238 = vpop.xlane.xlu0 %1237
        %v1239 = vsub.f32 %v1225, %v1235
        %v1240 = vsub.f32 %v1230, %v1238
        %v1241 = vmul.f32 %v1239, 1.442695
        %v1242 = vpow.pop %v1241
        %v1243 = vmul.f32 %v1240, 1.442695
        %v1244 = vpow.pop %v1243
        %v1245 = vsel %vm625, %v1242, 0.0
        %1246 = vadd.xlane.f32.xlu0 %v1245
        %v1247 = vpop.xlane.xlu0 %1246
        %v1248 = vsel %vm625, %v1244, 0.0
        %1249 = vadd.xlane.f32.xlu0 %v1248
        %v1250 = vpop.xlane.xlu0 %1249
        %s1251 = scalar_lea.vmem [#allocation3], 64
        %v1252 = vld [vmem:[%s1251] sm:$0xff]
        %v1253 = vld [vmem:[%s1251 + $0x8] sm:$0xff]
        %v1254 = vld [vmem:[%s1251 + $0x10] sm:$0xff]
        %v1255 = vld [vmem:[%s1251 + $0x18] sm:$0xff]
        %v1257 = vsel %vm625, %v1242, 0
        %v1260 = vsel %vm625, %v1244, 0
        %1262 = vmatprep.subr.mxu0 0.0
        %1263 = vmatpush1.msra.mxu0 0.0
        %1264 = vmatprep.subr.mxu0 0.0
        %1265 = vmatpush1.msra.mxu0 0.0
        %1266 = vmatprep.subr.mxu0 0.0
        %1267 = vmatpush1.msra.mxu0 0.0
        %1268 = vmatprep.subr.mxu0 0.0
        %1269 = vmatpush1.msra.mxu0 0.0
        %1270 = vmatprep.subr.mxu0 0.0
        %1271 = vmatpush1.msra.mxu0 0.0
        %1272 = vmatprep.subr.mxu0 0.0
        %1273 = vmatpush1.msra.mxu0 0.0
        %1274 = vmatprep.subr.mxu0 0.0
        %1275 = vmatpush1.msra.mxu0 0.0
        %1276 = vmatprep.subr.mxu0 0.0
        %1277 = vmatpush1.msra.mxu0 0.0
        %1278 = vmatprep.subr.mxu0 0.0
        %1279 = vmatpush1.msra.mxu0 0.0
        %1280 = vmatprep.subr.mxu0 0.0
        %1281 = vmatpush1.msra.mxu0 0.0
        %1282 = vmatprep.subr.mxu0 0.0
        %1283 = vmatpush1.msra.mxu0 0.0
        %1284 = vmatprep.subr.mxu0 0.0
        %1285 = vmatpush1.msra.mxu0 0.0
        %1286 = vmatprep.subr.mxu0 0.0
        %1287 = vmatpush1.msra.mxu0 %v1255
        %1288 = vmatprep.subr.mxu0 0.0
        %1289 = vmatpush1.msra.mxu0 %v1254
        %1290 = vmatprep.subr.mxu0 0.0
        %1291 = vmatpush1.msra.mxu0 %v1253
        %1292 = vmatprep.subr.mxu0 0.0
        %1293 = vmatpush1.msra.mxu0 %v1252
        %1294 = vmatprep.subr.mxu0 0.0
        %1295 = vmatpush2.msra.mxu0 0.0
        %1296 = vmatprep.subr.mxu0 0.0
        %1297 = vmatpush2.msra.mxu0 0.0
        %1298 = vmatprep.subr.mxu0 0.0
        %1299 = vmatpush2.msra.mxu0 0.0
        %1300 = vmatprep.subr.mxu0 0.0
        %1301 = vmatpush2.msra.mxu0 0.0
        %1302 = vmatprep.subr.mxu0 0.0
        %1303 = vmatpush2.msra.mxu0 0.0
        %1304 = vmatprep.subr.mxu0 0.0
        %1305 = vmatpush2.msra.mxu0 0.0
        %1306 = vmatprep.subr.mxu0 0.0
        %1307 = vmatpush2.msra.mxu0 0.0
        %1308 = vmatprep.subr.mxu0 0.0
        %1309 = vmatpush2.msra.mxu0 0.0
        %1310 = vmatprep.subr.mxu0 0.0
        %1311 = vmatpush2.msra.mxu0 0.0
        %1312 = vmatprep.subr.mxu0 0.0
        %1313 = vmatpush2.msra.mxu0 0.0
        %1314 = vmatprep.subr.mxu0 0.0
        %1315 = vmatpush2.msra.mxu0 0.0
        %1316 = vmatprep.subr.mxu0 0.0
        %1317 = vmatpush2.msra.mxu0 0.0
        %1318 = vmatprep.subr.mxu0 0.0
        %1319 = vmatpush2.msra.mxu0 0.0
        %1320 = vmatprep.subr.mxu0 0.0
        %1321 = vmatpush2.msra.mxu0 0.0
        %1322 = vmatprep.subr.mxu0 0.0
        %1323 = vmatpush2.msra.mxu0 0.0
        %1324 = vmatprep.subr.mxu0 0.0
        %1325 = vmatpush2.msra.mxu0 0.0
        %1326 = vmatprep.mubr.f32.mxu0 0.0
        %1327 = vmatmul.mubr.f32.gmra.mxu0 %v1257
        %v1328 = vpop.f32.mrf.mxu0
        %v1329 = vadd.f32 0.0, %v1328
        %v1330 = vpop.f32.mrf.mxu0
        %1331 = vmatprep.mubr.f32.mxu0 0.0
        %1332 = vmatmul.mubr.f32.gmra.mxu0 %v1260
        %v1333 = vpop.f32.mrf.mxu0
        %v1334 = vadd.f32 0.0, %v1333
        %v1335 = vpop.f32.mrf.mxu0
        %1336 = vdwg.mxu0
        %v1337 = vrcp.pop %v1247
        %v1338 = vrcp.pop %v1250
        %v1339 = vmul.f32 %v1329, %v1337
        %v1340 = vmul.f32 %v1334, %v1338
        %1343 = vrot.lane.b32.xlu0 %v1339, 16
        %v1344 = vpop.permute.xlu0 %1343
        %1345 = vrot.lane.b32.xlu0 %v1340, 16
        %v1346 = vpop.permute.xlu0 %1345
        %vm1349 = vcmask 195712
        %1350 = vst.msk [vmem:[#allocation4] sm:$0xff] %vm1349, %v1344
        %1351 = vst.msk [vmem:[#allocation4 + $0x8] sm:$0xff] %vm1349, %v1346
        %s1352 = scalar_lea.vmem [#allocation2], 96
        %v1353 = vld [vmem:[%s1352] sm:$0xff]
        %v1354 = vld [vmem:[%s1352 + $0x8] sm:$0xff]
        %v1355 = vld [vmem:[%s1352 + $0x10] sm:$0xff]
        %v1356 = vld [vmem:[%s1352 + $0x18] sm:$0xff]
        %1357 = vrot.lane.b32.xlu0 %v699, 104
        %v1358 = vpop.permute.xlu0 %1357
        %1359 = vrot.lane.b32.xlu0 %v704, 104
        %v1360 = vpop.permute.xlu0 %1359
        %v1361 = vsel %vm711, %v1358, 0
        %v1363 = vsel %vm711, %v1360, 0
        %v1366 = vsel %vm711, %v1353, 0
        %v1369 = vsel %vm711, %v1354, 0
        %v1372 = vsel %vm711, %v1355, 0
        %v1375 = vsel %vm711, %v1356, 0
        %1377 = vmatprep.subr.mxu0 0.0
        %1378 = vmatpush1.xpose.msra.mxu0 0.0
        %1379 = vmatprep.subr.mxu0 0.0
        %1380 = vmatpush1.xpose.msra.mxu0 0.0
        %1381 = vmatprep.subr.mxu0 0.0
        %1382 = vmatpush1.xpose.msra.mxu0 0.0
        %1383 = vmatprep.subr.mxu0 0.0
        %1384 = vmatpush1.xpose.msra.mxu0 0.0
        %1385 = vmatprep.subr.mxu0 0.0
        %1386 = vmatpush1.xpose.msra.mxu0 0.0
        %1387 = vmatprep.subr.mxu0 0.0
        %1388 = vmatpush1.xpose.msra.mxu0 0.0
        %1389 = vmatprep.subr.mxu0 0.0
        %1390 = vmatpush1.xpose.msra.mxu0 0.0
        %1391 = vmatprep.subr.mxu0 0.0
        %1392 = vmatpush1.xpose.msra.mxu0 0.0
        %1393 = vmatprep.subr.mxu0 0.0
        %1394 = vmatpush1.xpose.msra.mxu0 0.0
        %1395 = vmatprep.subr.mxu0 0.0
        %1396 = vmatpush1.xpose.msra.mxu0 0.0
        %1397 = vmatprep.subr.mxu0 0.0
        %1398 = vmatpush1.xpose.msra.mxu0 0.0
        %1399 = vmatprep.subr.mxu0 0.0
        %1400 = vmatpush1.xpose.msra.mxu0 0.0
        %1401 = vmatprep.subr.mxu0 0.0
        %1402 = vmatpush1.xpose.msra.mxu0 %v1375
        %1403 = vmatprep.subr.mxu0 0.0
        %1404 = vmatpush1.xpose.msra.mxu0 %v1372
        %1405 = vmatprep.subr.mxu0 0.0
        %1406 = vmatpush1.xpose.msra.mxu0 %v1369
        %1407 = vmatprep.subr.mxu0 0.0
        %1408 = vmatpush1.xpose.msra.mxu0 %v1366
        %1409 = vmatprep.subr.mxu0 0.0
        %1410 = vmatpush2.xpose.msra.mxu0 0.0
        %1411 = vmatprep.subr.mxu0 0.0
        %1412 = vmatpush2.xpose.msra.mxu0 0.0
        %1413 = vmatprep.subr.mxu0 0.0
        %1414 = vmatpush2.xpose.msra.mxu0 0.0
        %1415 = vmatprep.subr.mxu0 0.0
        %1416 = vmatpush2.xpose.msra.mxu0 0.0
        %1417 = vmatprep.subr.mxu0 0.0
        %1418 = vmatpush2.xpose.msra.mxu0 0.0
        %1419 = vmatprep.subr.mxu0 0.0
        %1420 = vmatpush2.xpose.msra.mxu0 0.0
        %1421 = vmatprep.subr.mxu0 0.0
        %1422 = vmatpush2.xpose.msra.mxu0 0.0
        %1423 = vmatprep.subr.mxu0 0.0
        %1424 = vmatpush2.xpose.msra.mxu0 0.0
        %1425 = vmatprep.subr.mxu0 0.0
        %1426 = vmatpush2.xpose.msra.mxu0 0.0
        %1427 = vmatprep.subr.mxu0 0.0
        %1428 = vmatpush2.xpose.msra.mxu0 0.0
        %1429 = vmatprep.subr.mxu0 0.0
        %1430 = vmatpush2.xpose.msra.mxu0 0.0
        %1431 = vmatprep.subr.mxu0 0.0
        %1432 = vmatpush2.xpose.msra.mxu0 0.0
        %1433 = vmatprep.subr.mxu0 0.0
        %1434 = vmatpush2.xpose.msra.mxu0 0.0
        %1435 = vmatprep.subr.mxu0 0.0
        %1436 = vmatpush2.xpose.msra.mxu0 0.0
        %1437 = vmatprep.subr.mxu0 0.0
        %1438 = vmatpush2.xpose.msra.mxu0 0.0
        %1439 = vmatprep.subr.mxu0 0.0
        %1440 = vmatpush2.xpose.msra.mxu0 0.0
        %1441 = vmatprep.mubr.f32.mxu0 0.0
        %1442 = vmatmul.mubr.f32.gmra.mxu0 %v1361
        %v1443 = vpop.f32.mrf.mxu0
        %v1444 = vadd.f32 0.0, %v1443
        %v1445 = vpop.f32.mrf.mxu0
        %1446 = vmatprep.mubr.f32.mxu0 0.0
        %1447 = vmatmul.mubr.f32.gmra.mxu0 %v1363
        %v1448 = vpop.f32.mrf.mxu0
        %v1449 = vadd.f32 0.0, %v1448
        %v1450 = vpop.f32.mrf.mxu0
        %1451 = vdwg.mxu0
        %v1452 = vsel %vm625, %v1444, -inf
        %1453 = vmax.xlane.f32.xlu0 %v1452
        %v1454 = vpop.xlane.xlu0 %1453
        %v1455 = vsel %vm625, %v1449, -inf
        %1456 = vmax.xlane.f32.xlu0 %v1455
        %v1457 = vpop.xlane.xlu0 %1456
        %v1458 = vsub.f32 %v1444, %v1454
        %v1459 = vsub.f32 %v1449, %v1457
        %v1460 = vmul.f32 %v1458, 1.442695
        %v1461 = vpow.pop %v1460
        %v1462 = vmul.f32 %v1459, 1.442695
        %v1463 = vpow.pop %v1462
        %v1464 = vsel %vm625, %v1461, 0.0
        %1465 = vadd.xlane.f32.xlu0 %v1464
        %v1466 = vpop.xlane.xlu0 %1465
        %v1467 = vsel %vm625, %v1463, 0.0
        %1468 = vadd.xlane.f32.xlu0 %v1467
        %v1469 = vpop.xlane.xlu0 %1468
        %s1470 = scalar_lea.vmem [#allocation3], 96
        %v1471 = vld [vmem:[%s1470] sm:$0xff]
        %v1472 = vld [vmem:[%s1470 + $0x8] sm:$0xff]
        %v1473 = vld [vmem:[%s1470 + $0x10] sm:$0xff]
        %v1474 = vld [vmem:[%s1470 + $0x18] sm:$0xff]
        %v1476 = vsel %vm625, %v1461, 0
        %v1479 = vsel %vm625, %v1463, 0
        %1481 = vmatprep.subr.mxu0 0.0
        %1482 = vmatpush1.msra.mxu0 0.0
        %1483 = vmatprep.subr.mxu0 0.0
        %1484 = vmatpush1.msra.mxu0 0.0
        %1485 = vmatprep.subr.mxu0 0.0
        %1486 = vmatpush1.msra.mxu0 0.0
        %1487 = vmatprep.subr.mxu0 0.0
        %1488 = vmatpush1.msra.mxu0 0.0
        %1489 = vmatprep.subr.mxu0 0.0
        %1490 = vmatpush1.msra.mxu0 0.0
        %1491 = vmatprep.subr.mxu0 0.0
        %1492 = vmatpush1.msra.mxu0 0.0
        %1493 = vmatprep.subr.mxu0 0.0
        %1494 = vmatpush1.msra.mxu0 0.0
        %1495 = vmatprep.subr.mxu0 0.0
        %1496 = vmatpush1.msra.mxu0 0.0
        %1497 = vmatprep.subr.mxu0 0.0
        %1498 = vmatpush1.msra.mxu0 0.0
        %1499 = vmatprep.subr.mxu0 0.0
        %1500 = vmatpush1.msra.mxu0 0.0
        %1501 = vmatprep.subr.mxu0 0.0
        %1502 = vmatpush1.msra.mxu0 0.0
        %1503 = vmatprep.subr.mxu0 0.0
        %1504 = vmatpush1.msra.mxu0 0.0
        %1505 = vmatprep.subr.mxu0 0.0
        %1506 = vmatpush1.msra.mxu0 %v1474
        %1507 = vmatprep.subr.mxu0 0.0
        %1508 = vmatpush1.msra.mxu0 %v1473
        %1509 = vmatprep.subr.mxu0 0.0
        %1510 = vmatpush1.msra.mxu0 %v1472
        %1511 = vmatprep.subr.mxu0 0.0
        %1512 = vmatpush1.msra.mxu0 %v1471
        %1513 = vmatprep.subr.mxu0 0.0
        %1514 = vmatpush2.msra.mxu0 0.0
        %1515 = vmatprep.subr.mxu0 0.0
        %1516 = vmatpush2.msra.mxu0 0.0
        %1517 = vmatprep.subr.mxu0 0.0
        %1518 = vmatpush2.msra.mxu0 0.0
        %1519 = vmatprep.subr.mxu0 0.0
        %1520 = vmatpush2.msra.mxu0 0.0
        %1521 = vmatprep.subr.mxu0 0.0
        %1522 = vmatpush2.msra.mxu0 0.0
        %1523 = vmatprep.subr.mxu0 0.0
        %1524 = vmatpush2.msra.mxu0 0.0
        %1525 = vmatprep.subr.mxu0 0.0
        %1526 = vmatpush2.msra.mxu0 0.0
        %1527 = vmatprep.subr.mxu0 0.0
        %1528 = vmatpush2.msra.mxu0 0.0
        %1529 = vmatprep.subr.mxu0 0.0
        %1530 = vmatpush2.msra.mxu0 0.0
        %1531 = vmatprep.subr.mxu0 0.0
        %1532 = vmatpush2.msra.mxu0 0.0
        %1533 = vmatprep.subr.mxu0 0.0
        %1534 = vmatpush2.msra.mxu0 0.0
        %1535 = vmatprep.subr.mxu0 0.0
        %1536 = vmatpush2.msra.mxu0 0.0
        %1537 = vmatprep.subr.mxu0 0.0
        %1538 = vmatpush2.msra.mxu0 0.0
        %1539 = vmatprep.subr.mxu0 0.0
        %1540 = vmatpush2.msra.mxu0 0.0
        %1541 = vmatprep.subr.mxu0 0.0
        %1542 = vmatpush2.msra.mxu0 0.0
        %1543 = vmatprep.subr.mxu0 0.0
        %1544 = vmatpush2.msra.mxu0 0.0
        %1545 = vmatprep.mubr.f32.mxu0 0.0
        %1546 = vmatmul.mubr.f32.gmra.mxu0 %v1476
        %v1547 = vpop.f32.mrf.mxu0
        %v1548 = vadd.f32 0.0, %v1547
        %v1549 = vpop.f32.mrf.mxu0
        %1550 = vmatprep.mubr.f32.mxu0 0.0
        %1551 = vmatmul.mubr.f32.gmra.mxu0 %v1479
        %v1552 = vpop.f32.mrf.mxu0
        %v1553 = vadd.f32 0.0, %v1552
        %v1554 = vpop.f32.mrf.mxu0
        %1555 = vdwg.mxu0
        %v1556 = vrcp.pop %v1466
        %v1557 = vrcp.pop %v1469
        %v1558 = vmul.f32 %v1548, %v1556
        %v1559 = vmul.f32 %v1553, %v1557
        %1562 = vrot.lane.b32.xlu0 %v1558, 24
        %v1563 = vpop.permute.xlu0 %1562
        %1564 = vrot.lane.b32.xlu0 %v1559, 24
        %v1565 = vpop.permute.xlu0 %1564
        %vm1568 = vcmask 261312
        %1569 = vst.msk [vmem:[#allocation4] sm:$0xff] %vm1568, %v1563
        %1570 = vst.msk [vmem:[#allocation4 + $0x8] sm:$0xff] %vm1568, %v1565
        %v1571 = vld [vmem:[#allocation4] sm:$0xff]
        %v1572 = vld [vmem:[#allocation4 + $0x8] sm:$0xff]
        %v1573 = vld [vmem:[%s6] sm:$0xff]
        %v1574 = vld [vmem:[%s6 + $0x8] sm:$0xff]
        %v1575 = vld [vmem:[%s6 + $0x10] sm:$0xff]
        %v1576 = vld [vmem:[%s6 + $0x18] sm:$0xff]
        %v1577 = vld [vmem:[%s7] sm:$0x1]
        %v1579 = vlaneseq
        %v1580 = vshrl.u32 %v1579, 7
        %v1581 = vsub.s32 0, %v1580
        %v1582 = vrot.slane %v1577, %v1581
        %v1585 = vsel %vm625, %v1571, 0
        %v1588 = vsel %vm625, %v1572, 0
        %1590 = vmatprep.subr.mxu0 0.0
        %1591 = vmatpush1.msra.mxu0 0.0
        %1592 = vmatprep.subr.mxu0 0.0
        %1593 = vmatpush1.msra.mxu0 0.0
        %1594 = vmatprep.subr.mxu0 0.0
        %1595 = vmatpush1.msra.mxu0 0.0
        %1596 = vmatprep.subr.mxu0 0.0
        %1597 = vmatpush1.msra.mxu0 0.0
        %1598 = vmatprep.subr.mxu0 0.0
        %1599 = vmatpush1.msra.mxu0 0.0
        %1600 = vmatprep.subr.mxu0 0.0
        %1601 = vmatpush1.msra.mxu0 0.0
        %1602 = vmatprep.subr.mxu0 0.0
        %1603 = vmatpush1.msra.mxu0 0.0
        %1604 = vmatprep.subr.mxu0 0.0
        %1605 = vmatpush1.msra.mxu0 0.0
        %1606 = vmatprep.subr.mxu0 0.0
        %1607 = vmatpush1.msra.mxu0 0.0
        %1608 = vmatprep.subr.mxu0 0.0
        %1609 = vmatpush1.msra.mxu0 0.0
        %1610 = vmatprep.subr.mxu0 0.0
        %1611 = vmatpush1.msra.mxu0 0.0
        %1612 = vmatprep.subr.mxu0 0.0
        %1613 = vmatpush1.msra.mxu0 0.0
        %1614 = vmatprep.subr.mxu0 0.0
        %1615 = vmatpush1.msra.mxu0 %v1576
        %1616 = vmatprep.subr.mxu0 0.0
        %1617 = vmatpush1.msra.mxu0 %v1575
        %1618 = vmatprep.subr.mxu0 0.0
        %1619 = vmatpush1.msra.mxu0 %v1574
        %1620 = vmatprep.subr.mxu0 0.0
        %1621 = vmatpush1.msra.mxu0 %v1573
        %1622 = vmatprep.subr.mxu0 0.0
        %1623 = vmatpush2.msra.mxu0 0.0
        %1624 = vmatprep.subr.mxu0 0.0
        %1625 = vmatpush2.msra.mxu0 0.0
        %1626 = vmatprep.subr.mxu0 0.0
        %1627 = vmatpush2.msra.mxu0 0.0
        %1628 = vmatprep.subr.mxu0 0.0
        %1629 = vmatpush2.msra.mxu0 0.0
        %1630 = vmatprep.subr.mxu0 0.0
        %1631 = vmatpush2.msra.mxu0 0.0
        %1632 = vmatprep.subr.mxu0 0.0
        %1633 = vmatpush2.msra.mxu0 0.0
        %1634 = vmatprep.subr.mxu0 0.0
        %1635 = vmatpush2.msra.mxu0 0.0
        %1636 = vmatprep.subr.mxu0 0.0
        %1637 = vmatpush2.msra.mxu0 0.0
        %1638 = vmatprep.subr.mxu0 0.0
        %1639 = vmatpush2.msra.mxu0 0.0
        %1640 = vmatprep.subr.mxu0 0.0
        %1641 = vmatpush2.msra.mxu0 0.0
        %1642 = vmatprep.subr.mxu0 0.0
        %1643 = vmatpush2.msra.mxu0 0.0
        %1644 = vmatprep.subr.mxu0 0.0
        %1645 = vmatpush2.msra.mxu0 0.0
        %1646 = vmatprep.subr.mxu0 0.0
        %1647 = vmatpush2.msra.mxu0 0.0
        %1648 = vmatprep.subr.mxu0 0.0
        %1649 = vmatpush2.msra.mxu0 0.0
        %1650 = vmatprep.subr.mxu0 0.0
        %1651 = vmatpush2.msra.mxu0 0.0
        %1652 = vmatprep.subr.mxu0 0.0
        %1653 = vmatpush2.msra.mxu0 0.0
        %1654 = vmatprep.mubr.f32.mxu0 0.0
        %1655 = vmatmul.mubr.f32.gmra.mxu0 %v1585
        %v1656 = vpop.f32.mrf.mxu0
        %v1657 = vadd.f32 %v1582, %v1656
        %v1658 = vpop.f32.mrf.mxu0
        %1659 = vmatprep.mubr.f32.mxu0 0.0
        %1660 = vmatmul.mubr.f32.gmra.mxu0 %v1588
        %v1661 = vpop.f32.mrf.mxu0
        %v1662 = vadd.f32 %v1582, %v1661
        %v1663 = vpop.f32.mrf.mxu0
        %1664 = vdwg.mxu0
        %1665 = vst.msk [vmem:[%s353] sm:$0xff] %vm625, %v1657
        %1666 = vst.msk [vmem:[%s353 + $0x8] sm:$0xff] %vm625, %v1662
        %s1667 = sand.u32 %s225, 1
        %s1668 = scalar_lea.sflag [#allocation7], %s1667
        %s1669 = sand.u32 %s225, 1
        %s1670 = smul.addr %s1669, 16
        %s1671 = scalar_lea.vmem [#allocation8], %s1670
        // Predicated region
        $region61: #{tpu_custom_call.1} parent=51 // pred_check
          %p1672 = pneg %p235
        $region62: #{tpu_custom_call.1} parent=51 // pred_check_branch
          %1674 = sbr.rel (%p1672) target = $region64
        $region63: #{tpu_custom_call.1} parent=51 // pred_region
          %s1675 = smul.u32 2, %s28
          %s1677 = ssub.s32 256, 256
          %1678 = vsyncadd %s1668, %s1677
          %s1679 = smul.addr %s27, 2
          %s1680 = sadd.s32 %s1675, %s1679
          %s1681 = smul.addr %s1680, 128
          %s1682 = scalar_lea.hbm %s8, %s1681
          %s1683 = sshll.u32 %s1671, 4
          %s1684 = int_to_ptr.vmem [resolvable:$true] %s1683
          %1689 = dma.vmem_to_hbm [thread:$0]  %s1684, 256, %s1682, %s1668, 128, 128, 8
        $region64: #{tpu_custom_call.1} parent=51 // pred_fallthru
          _
      $region52: #{tpu_custom_call.1} parent=5 // pred_fallthru
        _
      %p1690 = scmp.le.s32.totalorder 2, %s18
      // Predicated region
      $region65: #{tpu_custom_call.1} parent=5 // pred_check
        %p1691 = pneg %p1690
      $region66: #{tpu_custom_call.1} parent=5 // pred_check_branch
        %1693 = sbr.rel (%p1691) target = $region68
      $region67: #{tpu_custom_call.1} parent=5 // pred_region
        %s1694 = ssub.s32 %s18, 2
        // Predicated region
        $region69: #{tpu_custom_call.1} parent=67 // pred_check
          %p1695 = pneg %p241
        $region70: #{tpu_custom_call.1} parent=67 // pred_check_branch
          %1697 = sbr.rel (%p1695) target = $region72
        $region71: #{tpu_custom_call.1} parent=67 // pred_region
          %s1698 = sand.u32 %s226, 1
          %s1699 = scalar_lea.sflag [#allocation7], %s1698
          %s1700 = sand.u32 %s226, 1
          %s1701 = smul.addr %s1700, 16
          %s1702 = scalar_lea.vmem [#allocation8], %s1701
          %1703 = dma.done %s1699, 256
        $region72: #{tpu_custom_call.1} parent=67 // pred_fallthru
          _
      $region68: #{tpu_custom_call.1} parent=5 // pred_fallthru
        _
    $region6: #{tpu_custom_call.1} parent=1 // loop_footer
      %s22 = sadd.s32 1, %s18
    $region7: #{tpu_custom_call.1} parent=1 // loop_footer_branch
      %17 = sbr.rel target = $region3
    $region8: #{tpu_custom_call.1} parent=1 // loop_exit
      _
    %1704 = vsyncpa [#allocation6], 1
    %s1705 = scalar_lea.sflag [#allocation6], 1
    %1706 = vsyncpa %s1705, 1
    %1707 = vsyncpa [#allocation7], 1
    %s1708 = scalar_lea.sflag [#allocation7], 1
    %1709 = vsyncpa %s1708, 1

</llo_original>
